<compile_context>
chip_gen: v7x
topology: tpu7x:2x2x1
jax: 0.10.0
libtpu: 0.0.40
codegen_flags: <defaults>
</compile_context>

<pallas_src>
import functools

import jax
import jax.numpy as jnp
import numpy as np
from jax.experimental import pallas as pl
from jax.experimental.pallas import tpu as pltpu

HIDDEN = 128          # GRU hidden size (fixed by the module)
FC1 = 512
FC2 = 256


def jassnet_kernel(x_ref, w1_ref, b1_ref, w2_ref, b2_ref,
                   wih_ref, bih_ref, whh_ref, bhh_ref,
                   wh_ref, bh_ref, out_ref, *, action_dim):
    """Whole forward pass in one kernel.

    Args (all VMEM refs):
      x_ref   : [B, D_in]
      w1_ref  : [D_in, 512], b1_ref: [1, 512]
      w2_ref  : [512, 256],  b2_ref: [1, 256]
      wih_ref : [256, 384],  bih_ref: [1, 384]   (GRU input gates, order r|z|n)
      whh_ref : [128, 384],  bhh_ref: [1, 384]   (GRU hidden gates, order r|z|n)
      wh_ref  : [128, P],    bh_ref:  [1, P]     fused head weights:
                 cols [0, A)      -> policy head
                 col  A           -> value head
                 cols (A, P)      -> zero padding (P multiple of 128)
      out_ref : [B, P]  cols [0, A) = softmax policy, col A = value, rest = 0
    """
    H = HIDDEN
    B = x_ref.shape[0]
    A = action_dim

    # --- MLP trunk: fc1 -> relu -> fc2 -> relu (MXU matmuls) ---
    h1 = jnp.maximum(
        jnp.dot(x_ref[...], w1_ref[...], preferred_element_type=jnp.float32)
        + b1_ref[...], 0.0)
    h2 = jnp.maximum(
        jnp.dot(h1, w2_ref[...], preferred_element_type=jnp.float32)
        + b2_ref[...], 0.0)

    # --- GRU: precompute input-side gate projections for all "timesteps" ---
    gi = (jnp.dot(h2, wih_ref[...], preferred_element_type=jnp.float32)
          + bih_ref[...])                          # [B, 3H]

    # Hoist loop-invariants; fold bhh[r|z] into the precompute (they enter
    # additively).  bhh[n] must stay inside the r * (.) term.
    whh = whh_ref[...]                             # [H, 3H]
    bhh = bhh_ref[...]                             # [1, 3H]
    gi_rz = gi[:, :2 * H] + bhh[:, :2 * H]         # [B, 2H]
    gi_n = gi[:, 2 * H:]                           # [B, H]
    bhn = bhh[:, 2 * H:]                           # [1, H]

    # Sequential recurrence over the B axis (PyTorch GRU, gate order r, z, n):
    #   r_t = sigmoid(Wir x_t + bir + Whr h_{t-1} + bhr)
    #   z_t = sigmoid(Wiz x_t + biz + Whz h_{t-1} + bhz)
    #   n_t = tanh  (Win x_t + bin + r_t * (Whn h_{t-1} + bhn))
    #   h_t = (1 - z_t) * n_t + z_t * h_{t-1}
    # Fully unrolled (B is small & static); hidden states stay in registers.
    h_prev = jnp.zeros((1, H), dtype=jnp.float32)
    hs_rows = []
    for t in range(B):
        gh = jnp.dot(h_prev, whh, preferred_element_type=jnp.float32)  # [1, 3H]
        rz = jax.nn.sigmoid(gi_rz[t:t + 1, :] + gh[:, :2 * H])         # fused r|z
        r = rz[:, :H]
        z = rz[:, H:]
        n = jnp.tanh(gi_n[t:t + 1, :] + r * (gh[:, 2 * H:] + bhn))
        h_prev = (1.0 - z) * n + z * h_prev
        hs_rows.append(h_prev)
    hs = jnp.concatenate(hs_rows, axis=0)          # [B, H]

    # --- fused heads: one lane-dense matmul, masked softmax on padded block ---
    logits = (jnp.dot(hs, wh_ref[...], preferred_element_type=jnp.float32)
              + bh_ref[...])                       # [B, P]
    P = logits.shape[-1]
    col = jax.lax.broadcasted_iota(jnp.int32, (B, P), 1)
    masked = jnp.where(col < A, logits, -jnp.inf)  # pad + value lanes excluded
    m = jnp.max(masked, axis=-1, keepdims=True)
    e = jnp.exp(masked - m)                        # exp(-inf) = 0 on masked lanes
    s = jnp.sum(e, axis=-1, keepdims=True)
    probs = e * pl.reciprocal(s, approx=False)     # EUP reciprocal, full precision
    # Single lane-dense output: softmax probs in [:A), raw value in col A.
    out_ref[...] = probs + jnp.where(col == A, logits, 0.0)


def init_params(key, input_dim, action_dim):
    """Deterministic synthetic parameters, PyTorch-style uniform init, stored in
    PyTorch convention ([out, in] weights, gate order r|z|n for the GRU)."""
    ks = jax.random.split(key, 12)

    def lin(kw, kb, out_d, in_d):
        bound = 1.0 / np.sqrt(in_d)
        w = jax.random.uniform(kw, (out_d, in_d), jnp.float32, -bound, bound)
        b = jax.random.uniform(kb, (out_d,), jnp.float32, -bound, bound)
        return w, b

    w1, b1 = lin(ks[0], ks[1], FC1, input_dim)
    w2, b2 = lin(ks[2], ks[3], FC2, FC1)
    gb = 1.0 / np.sqrt(HIDDEN)
    wih = jax.random.uniform(ks[4], (3 * HIDDEN, FC2), jnp.float32, -gb, gb)
    whh = jax.random.uniform(ks[5], (3 * HIDDEN, HIDDEN), jnp.float32, -gb, gb)
    bih = jax.random.uniform(ks[6], (3 * HIDDEN,), jnp.float32, -gb, gb)
    bhh = jax.random.uniform(ks[7], (3 * HIDDEN,), jnp.float32, -gb, gb)
    wp, bp = lin(ks[8], ks[9], action_dim, HIDDEN)
    wv, bv = lin(ks[10], ks[11], 1, HIDDEN)
    return dict(w1=w1, b1=b1, w2=w2, b2=b2, wih=wih, bih=bih, whh=whh, bhh=bhh,
                wp=wp, bp=bp, wv=wv, bv=bv)


@jax.jit
def jassnet_forward(x, params):
    B = x.shape[0]
    A = params["wp"].shape[0]
    P = ((A + 1) + 127) // 128 * 128               # padded head width (lane-dense)

    # Fused head weights: policy columns [0, A), value column A, zero pad after.
    w_head = jnp.zeros((HIDDEN, P), jnp.float32)
    w_head = w_head.at[:, :A].set(params["wp"].T)
    w_head = w_head.at[:, A].set(params["wv"][0, :])
    b_head = jnp.zeros((1, P), jnp.float32)
    b_head = b_head.at[0, :A].set(params["bp"])
    b_head = b_head.at[0, A].set(params["bv"][0])

    # Pre-transpose weights to [in, out]; biases as [1, out] rows (plain-JAX glue).
    args = (
        x,
        params["w1"].T, params["b1"][None, :],
        params["w2"].T, params["b2"][None, :],
        params["wih"].T, params["bih"][None, :],
        params["whh"].T, params["bhh"][None, :],
        w_head, b_head,
    )

    vmem = pl.BlockSpec(memory_space=pltpu.MemorySpace.VMEM)
    out = pl.pallas_call(
        functools.partial(jassnet_kernel, action_dim=A),
        out_shape=jax.ShapeDtypeStruct((B, P), jnp.float32),
        in_specs=[vmem] * len(args),
        out_specs=vmem,
    )(*args)

    policy = out[:, :A]
    value = out[:, A:A + 1]
    return policy, value


def jassnet_reference(x, p):
    """Pure-JAX reference reproducing the PyTorch forward semantics."""
    h = jax.nn.relu(x @ p["w1"].T + p["b1"])
    h = jax.nn.relu(h @ p["w2"].T + p["b2"])
    H = HIDDEN

    def gru_step(h_prev, x_t):
        gi = p["wih"] @ x_t + p["bih"]
        gh = p["whh"] @ h_prev + p["bhh"]
        r = jax.nn.sigmoid(gi[:H] + gh[:H])
        z = jax.nn.sigmoid(gi[H:2 * H] + gh[H:2 * H])
        n = jnp.tanh(gi[2 * H:] + r * gh[2 * H:])
        h_new = (1.0 - z) * n + z * h_prev
        return h_new, h_new

    _, hs = jax.lax.scan(gru_step, jnp.zeros((H,), jnp.float32), h)
    logits = hs @ p["wp"].T + p["bp"]
    policy = jax.nn.softmax(logits, axis=-1)
    value = hs @ p["wv"].T + p["bv"]
    return policy, value


if __name__ == "__main__":
    B = 8            # batch (also the GRU sequence length, per the module's forward)
    INPUT_DIM = 64
    ACTION_DIM = 64

    key = jax.random.PRNGKey(0)
    kx, kp = jax.random.split(key)
    x = jax.random.normal(kx, (B, INPUT_DIM), jnp.float32)
    params = init_params(kp, INPUT_DIM, ACTION_DIM)

    policy, value = jassnet_forward(x, params)
    policy, value = jax.block_until_ready((policy, value))

    ref_policy, ref_value = jassnet_reference(x, params)
    np.testing.assert_allclose(np.asarray(policy), np.asarray(ref_policy),
                               rtol=1e-5, atol=1e-5)
    np.testing.assert_allclose(np.asarray(value), np.asarray(ref_value),
                               rtol=1e-5, atol=1e-5)
    assert policy.shape == (B, ACTION_DIM) and value.shape == (B, 1)

    print("KERNEL_OK")
</pallas_src>

<mosaic_0001>
module attributes {stable_mosaic.version = 11 : i64} {
  func.func @jassnet_kernel(%arg0: memref<8x64xf32, #tpu.memory_space<vmem>>, %arg1: memref<64x512xf32, #tpu.memory_space<vmem>>, %arg2: memref<1x512xf32, #tpu.memory_space<vmem>>, %arg3: memref<512x256xf32, #tpu.memory_space<vmem>>, %arg4: memref<1x256xf32, #tpu.memory_space<vmem>>, %arg5: memref<256x384xf32, #tpu.memory_space<vmem>>, %arg6: memref<1x384xf32, #tpu.memory_space<vmem>>, %arg7: memref<128x384xf32, #tpu.memory_space<vmem>>, %arg8: memref<1x384xf32, #tpu.memory_space<vmem>>, %arg9: memref<128x128xf32, #tpu.memory_space<vmem>>, %arg10: memref<1x128xf32, #tpu.memory_space<vmem>>, %arg11: memref<8x128xf32, #tpu.memory_space<vmem>>) attributes {dimension_semantics = [], scalar_prefetch = 0 : i64, scratch_operands = 0 : i64, tpu.core_type = #tpu.core_type<tc>} {
    %c0 = arith.constant 0 : index
    %c0_0 = arith.constant 0 : index
    %0 = vector.load %arg0[%c0, %c0_0] : memref<8x64xf32, #tpu.memory_space<vmem>>, vector<8x64xf32>
    %c0_1 = arith.constant 0 : index
    %c0_2 = arith.constant 0 : index
    %1 = vector.load %arg1[%c0_1, %c0_2] : memref<64x512xf32, #tpu.memory_space<vmem>>, vector<64x512xf32>
    %cst = arith.constant dense<0.000000e+00> : vector<8x512xf32>
    %2 = tpu.matmul %0, %1, %cst {dimension_numbers = #tpu.dot_dimension_numbers<[1], [0], [0], [1], [0, 0, 1, 1], [], []>} : vector<8x64xf32>, vector<64x512xf32>, vector<8x512xf32> -> vector<8x512xf32>
    %c0_3 = arith.constant 0 : index
    %c0_4 = arith.constant 0 : index
    %3 = vector.load %arg2[%c0_3, %c0_4] : memref<1x512xf32, #tpu.memory_space<vmem>>, vector<1x512xf32>
    %4 = vector.broadcast %3 : vector<1x512xf32> to vector<8x512xf32>
    %5 = arith.addf %2, %4 : vector<8x512xf32>
    %cst_5 = arith.constant 0.000000e+00 : f32
    %6 = vector.broadcast %cst_5 : f32 to vector<8x512xf32>
    %7 = arith.maximumf %5, %6 : vector<8x512xf32>
    %c0_6 = arith.constant 0 : index
    %c0_7 = arith.constant 0 : index
    %8 = vector.load %arg3[%c0_6, %c0_7] : memref<512x256xf32, #tpu.memory_space<vmem>>, vector<512x256xf32>
    %cst_8 = arith.constant dense<0.000000e+00> : vector<8x256xf32>
    %9 = tpu.matmul %7, %8, %cst_8 {dimension_numbers = #tpu.dot_dimension_numbers<[1], [0], [0], [1], [0, 0, 1, 1], [], []>} : vector<8x512xf32>, vector<512x256xf32>, vector<8x256xf32> -> vector<8x256xf32>
    %c0_9 = arith.constant 0 : index
    %c0_10 = arith.constant 0 : index
    %10 = vector.load %arg4[%c0_9, %c0_10] : memref<1x256xf32, #tpu.memory_space<vmem>>, vector<1x256xf32>
    %11 = vector.broadcast %10 : vector<1x256xf32> to vector<8x256xf32>
    %12 = arith.addf %9, %11 : vector<8x256xf32>
    %cst_11 = arith.constant 0.000000e+00 : f32
    %13 = vector.broadcast %cst_11 : f32 to vector<8x256xf32>
    %14 = arith.maximumf %12, %13 : vector<8x256xf32>
    %c0_12 = arith.constant 0 : index
    %c0_13 = arith.constant 0 : index
    %15 = vector.load %arg5[%c0_12, %c0_13] : memref<256x384xf32, #tpu.memory_space<vmem>>, vector<256x384xf32>
    %cst_14 = arith.constant dense<0.000000e+00> : vector<8x384xf32>
    %16 = tpu.matmul %14, %15, %cst_14 {dimension_numbers = #tpu.dot_dimension_numbers<[1], [0], [0], [1], [0, 0, 1, 1], [], []>} : vector<8x256xf32>, vector<256x384xf32>, vector<8x384xf32> -> vector<8x384xf32>
    %c0_15 = arith.constant 0 : index
    %c0_16 = arith.constant 0 : index
    %17 = vector.load %arg6[%c0_15, %c0_16] : memref<1x384xf32, #tpu.memory_space<vmem>>, vector<1x384xf32>
    %18 = vector.broadcast %17 : vector<1x384xf32> to vector<8x384xf32>
    %19 = arith.addf %16, %18 : vector<8x384xf32>
    %c0_17 = arith.constant 0 : index
    %c0_18 = arith.constant 0 : index
    %20 = vector.load %arg7[%c0_17, %c0_18] : memref<128x384xf32, #tpu.memory_space<vmem>>, vector<128x384xf32>
    %c0_19 = arith.constant 0 : index
    %c0_20 = arith.constant 0 : index
    %21 = vector.load %arg8[%c0_19, %c0_20] : memref<1x384xf32, #tpu.memory_space<vmem>>, vector<1x384xf32>
    %22 = vector.extract_strided_slice %19 {offsets = [0, 0], sizes = [8, 256], strides = [1, 1]} : vector<8x384xf32> to vector<8x256xf32>
    %23 = vector.extract_strided_slice %21 {offsets = [0, 0], sizes = [1, 256], strides = [1, 1]} : vector<1x384xf32> to vector<1x256xf32>
    %24 = vector.broadcast %23 : vector<1x256xf32> to vector<8x256xf32>
    %25 = arith.addf %22, %24 : vector<8x256xf32>
    %26 = vector.extract_strided_slice %19 {offsets = [0, 256], sizes = [8, 128], strides = [1, 1]} : vector<8x384xf32> to vector<8x128xf32>
    %27 = vector.extract_strided_slice %21 {offsets = [0, 256], sizes = [1, 128], strides = [1, 1]} : vector<1x384xf32> to vector<1x128xf32>
    %cst_21 = arith.constant 0.000000e+00 : f32
    %28 = vector.broadcast %cst_21 : f32 to vector<1x128xf32>
    %cst_22 = arith.constant dense<0.000000e+00> : vector<1x384xf32>
    %29 = tpu.matmul %28, %20, %cst_22 {dimension_numbers = #tpu.dot_dimension_numbers<[1], [0], [0], [1], [0, 0, 1, 1], [], []>} : vector<1x128xf32>, vector<128x384xf32>, vector<1x384xf32> -> vector<1x384xf32>
    %30 = vector.extract_strided_slice %25 {offsets = [0, 0], sizes = [1, 256], strides = [1, 1]} : vector<8x256xf32> to vector<1x256xf32>
    %31 = vector.extract_strided_slice %29 {offsets = [0, 0], sizes = [1, 256], strides = [1, 1]} : vector<1x384xf32> to vector<1x256xf32>
    %32 = arith.addf %30, %31 : vector<1x256xf32>
    %33 = arith.negf %32 : vector<1x256xf32>
    %34 = math.exp %33 : vector<1x256xf32>
    %cst_23 = arith.constant 1.000000e+00 : f32
    %35 = vector.broadcast %cst_23 : f32 to vector<1x256xf32>
    %36 = arith.addf %35, %34 : vector<1x256xf32>
    %37 = arith.divf %35, %36 : vector<1x256xf32>
    %38 = vector.extract_strided_slice %37 {offsets = [0, 0], sizes = [1, 128], strides = [1, 1]} : vector<1x256xf32> to vector<1x128xf32>
    %39 = vector.extract_strided_slice %37 {offsets = [0, 128], sizes = [1, 128], strides = [1, 1]} : vector<1x256xf32> to vector<1x128xf32>
    %40 = vector.extract_strided_slice %26 {offsets = [0, 0], sizes = [1, 128], strides = [1, 1]} : vector<8x128xf32> to vector<1x128xf32>
    %41 = vector.extract_strided_slice %29 {offsets = [0, 256], sizes = [1, 128], strides = [1, 1]} : vector<1x384xf32> to vector<1x128xf32>
    %42 = arith.addf %41, %27 : vector<1x128xf32>
    %43 = arith.mulf %38, %42 : vector<1x128xf32>
    %44 = arith.addf %40, %43 : vector<1x128xf32>
    %45 = math.tanh %44 : vector<1x128xf32>
    %cst_24 = arith.constant 1.000000e+00 : f32
    %46 = vector.broadcast %cst_24 : f32 to vector<1x128xf32>
    %47 = arith.subf %46, %39 : vector<1x128xf32>
    %48 = arith.mulf %47, %45 : vector<1x128xf32>
    %49 = arith.mulf %39, %28 : vector<1x128xf32>
    %50 = arith.addf %48, %49 : vector<1x128xf32>
    %cst_25 = arith.constant dense<0.000000e+00> : vector<1x384xf32>
    %51 = tpu.matmul %50, %20, %cst_25 {dimension_numbers = #tpu.dot_dimension_numbers<[1], [0], [0], [1], [0, 0, 1, 1], [], []>} : vector<1x128xf32>, vector<128x384xf32>, vector<1x384xf32> -> vector<1x384xf32>
    %52 = vector.extract_strided_slice %25 {offsets = [1, 0], sizes = [1, 256], strides = [1, 1]} : vector<8x256xf32> to vector<1x256xf32>
    %53 = vector.extract_strided_slice %51 {offsets = [0, 0], sizes = [1, 256], strides = [1, 1]} : vector<1x384xf32> to vector<1x256xf32>
    %54 = arith.addf %52, %53 : vector<1x256xf32>
    %55 = arith.negf %54 : vector<1x256xf32>
    %56 = math.exp %55 : vector<1x256xf32>
    %cst_26 = arith.constant 1.000000e+00 : f32
    %57 = vector.broadcast %cst_26 : f32 to vector<1x256xf32>
    %58 = arith.addf %57, %56 : vector<1x256xf32>
    %59 = arith.divf %57, %58 : vector<1x256xf32>
    %60 = vector.extract_strided_slice %59 {offsets = [0, 0], sizes = [1, 128], strides = [1, 1]} : vector<1x256xf32> to vector<1x128xf32>
    %61 = vector.extract_strided_slice %59 {offsets = [0, 128], sizes = [1, 128], strides = [1, 1]} : vector<1x256xf32> to vector<1x128xf32>
    %62 = vector.extract_strided_slice %26 {offsets = [1, 0], sizes = [1, 128], strides = [1, 1]} : vector<8x128xf32> to vector<1x128xf32>
    %63 = vector.extract_strided_slice %51 {offsets = [0, 256], sizes = [1, 128], strides = [1, 1]} : vector<1x384xf32> to vector<1x128xf32>
    %64 = arith.addf %63, %27 : vector<1x128xf32>
    %65 = arith.mulf %60, %64 : vector<1x128xf32>
    %66 = arith.addf %62, %65 : vector<1x128xf32>
    %67 = math.tanh %66 : vector<1x128xf32>
    %cst_27 = arith.constant 1.000000e+00 : f32
    %68 = vector.broadcast %cst_27 : f32 to vector<1x128xf32>
    %69 = arith.subf %68, %61 : vector<1x128xf32>
    %70 = arith.mulf %69, %67 : vector<1x128xf32>
    %71 = arith.mulf %61, %50 : vector<1x128xf32>
    %72 = arith.addf %70, %71 : vector<1x128xf32>
    %cst_28 = arith.constant dense<0.000000e+00> : vector<1x384xf32>
    %73 = tpu.matmul %72, %20, %cst_28 {dimension_numbers = #tpu.dot_dimension_numbers<[1], [0], [0], [1], [0, 0, 1, 1], [], []>} : vector<1x128xf32>, vector<128x384xf32>, vector<1x384xf32> -> vector<1x384xf32>
    %74 = vector.extract_strided_slice %25 {offsets = [2, 0], sizes = [1, 256], strides = [1, 1]} : vector<8x256xf32> to vector<1x256xf32>
    %75 = vector.extract_strided_slice %73 {offsets = [0, 0], sizes = [1, 256], strides = [1, 1]} : vector<1x384xf32> to vector<1x256xf32>
    %76 = arith.addf %74, %75 : vector<1x256xf32>
    %77 = arith.negf %76 : vector<1x256xf32>
    %78 = math.exp %77 : vector<1x256xf32>
    %cst_29 = arith.constant 1.000000e+00 : f32
    %79 = vector.broadcast %cst_29 : f32 to vector<1x256xf32>
    %80 = arith.addf %79, %78 : vector<1x256xf32>
    %81 = arith.divf %79, %80 : vector<1x256xf32>
    %82 = vector.extract_strided_slice %81 {offsets = [0, 0], sizes = [1, 128], strides = [1, 1]} : vector<1x256xf32> to vector<1x128xf32>
    %83 = vector.extract_strided_slice %81 {offsets = [0, 128], sizes = [1, 128], strides = [1, 1]} : vector<1x256xf32> to vector<1x128xf32>
    %84 = vector.extract_strided_slice %26 {offsets = [2, 0], sizes = [1, 128], strides = [1, 1]} : vector<8x128xf32> to vector<1x128xf32>
    %85 = vector.extract_strided_slice %73 {offsets = [0, 256], sizes = [1, 128], strides = [1, 1]} : vector<1x384xf32> to vector<1x128xf32>
    %86 = arith.addf %85, %27 : vector<1x128xf32>
    %87 = arith.mulf %82, %86 : vector<1x128xf32>
    %88 = arith.addf %84, %87 : vector<1x128xf32>
    %89 = math.tanh %88 : vector<1x128xf32>
    %cst_30 = arith.constant 1.000000e+00 : f32
    %90 = vector.broadcast %cst_30 : f32 to vector<1x128xf32>
    %91 = arith.subf %90, %83 : vector<1x128xf32>
    %92 = arith.mulf %91, %89 : vector<1x128xf32>
    %93 = arith.mulf %83, %72 : vector<1x128xf32>
    %94 = arith.addf %92, %93 : vector<1x128xf32>
    %cst_31 = arith.constant dense<0.000000e+00> : vector<1x384xf32>
    %95 = tpu.matmul %94, %20, %cst_31 {dimension_numbers = #tpu.dot_dimension_numbers<[1], [0], [0], [1], [0, 0, 1, 1], [], []>} : vector<1x128xf32>, vector<128x384xf32>, vector<1x384xf32> -> vector<1x384xf32>
    %96 = vector.extract_strided_slice %25 {offsets = [3, 0], sizes = [1, 256], strides = [1, 1]} : vector<8x256xf32> to vector<1x256xf32>
    %97 = vector.extract_strided_slice %95 {offsets = [0, 0], sizes = [1, 256], strides = [1, 1]} : vector<1x384xf32> to vector<1x256xf32>
    %98 = arith.addf %96, %97 : vector<1x256xf32>
    %99 = arith.negf %98 : vector<1x256xf32>
    %100 = math.exp %99 : vector<1x256xf32>
    %cst_32 = arith.constant 1.000000e+00 : f32
    %101 = vector.broadcast %cst_32 : f32 to vector<1x256xf32>
    %102 = arith.addf %101, %100 : vector<1x256xf32>
    %103 = arith.divf %101, %102 : vector<1x256xf32>
    %104 = vector.extract_strided_slice %103 {offsets = [0, 0], sizes = [1, 128], strides = [1, 1]} : vector<1x256xf32> to vector<1x128xf32>
    %105 = vector.extract_strided_slice %103 {offsets = [0, 128], sizes = [1, 128], strides = [1, 1]} : vector<1x256xf32> to vector<1x128xf32>
    %106 = vector.extract_strided_slice %26 {offsets = [3, 0], sizes = [1, 128], strides = [1, 1]} : vector<8x128xf32> to vector<1x128xf32>
    %107 = vector.extract_strided_slice %95 {offsets = [0, 256], sizes = [1, 128], strides = [1, 1]} : vector<1x384xf32> to vector<1x128xf32>
    %108 = arith.addf %107, %27 : vector<1x128xf32>
    %109 = arith.mulf %104, %108 : vector<1x128xf32>
    %110 = arith.addf %106, %109 : vector<1x128xf32>
    %111 = math.tanh %110 : vector<1x128xf32>
    %cst_33 = arith.constant 1.000000e+00 : f32
    %112 = vector.broadcast %cst_33 : f32 to vector<1x128xf32>
    %113 = arith.subf %112, %105 : vector<1x128xf32>
    %114 = arith.mulf %113, %111 : vector<1x128xf32>
    %115 = arith.mulf %105, %94 : vector<1x128xf32>
    %116 = arith.addf %114, %115 : vector<1x128xf32>
    %cst_34 = arith.constant dense<0.000000e+00> : vector<1x384xf32>
    %117 = tpu.matmul %116, %20, %cst_34 {dimension_numbers = #tpu.dot_dimension_numbers<[1], [0], [0], [1], [0, 0, 1, 1], [], []>} : vector<1x128xf32>, vector<128x384xf32>, vector<1x384xf32> -> vector<1x384xf32>
    %118 = vector.extract_strided_slice %25 {offsets = [4, 0], sizes = [1, 256], strides = [1, 1]} : vector<8x256xf32> to vector<1x256xf32>
    %119 = vector.extract_strided_slice %117 {offsets = [0, 0], sizes = [1, 256], strides = [1, 1]} : vector<1x384xf32> to vector<1x256xf32>
    %120 = arith.addf %118, %119 : vector<1x256xf32>
    %121 = arith.negf %120 : vector<1x256xf32>
    %122 = math.exp %121 : vector<1x256xf32>
    %cst_35 = arith.constant 1.000000e+00 : f32
    %123 = vector.broadcast %cst_35 : f32 to vector<1x256xf32>
    %124 = arith.addf %123, %122 : vector<1x256xf32>
    %125 = arith.divf %123, %124 : vector<1x256xf32>
    %126 = vector.extract_strided_slice %125 {offsets = [0, 0], sizes = [1, 128], strides = [1, 1]} : vector<1x256xf32> to vector<1x128xf32>
    %127 = vector.extract_strided_slice %125 {offsets = [0, 128], sizes = [1, 128], strides = [1, 1]} : vector<1x256xf32> to vector<1x128xf32>
    %128 = vector.extract_strided_slice %26 {offsets = [4, 0], sizes = [1, 128], strides = [1, 1]} : vector<8x128xf32> to vector<1x128xf32>
    %129 = vector.extract_strided_slice %117 {offsets = [0, 256], sizes = [1, 128], strides = [1, 1]} : vector<1x384xf32> to vector<1x128xf32>
    %130 = arith.addf %129, %27 : vector<1x128xf32>
    %131 = arith.mulf %126, %130 : vector<1x128xf32>
    %132 = arith.addf %128, %131 : vector<1x128xf32>
    %133 = math.tanh %132 : vector<1x128xf32>
    %cst_36 = arith.constant 1.000000e+00 : f32
    %134 = vector.broadcast %cst_36 : f32 to vector<1x128xf32>
    %135 = arith.subf %134, %127 : vector<1x128xf32>
    %136 = arith.mulf %135, %133 : vector<1x128xf32>
    %137 = arith.mulf %127, %116 : vector<1x128xf32>
    %138 = arith.addf %136, %137 : vector<1x128xf32>
    %cst_37 = arith.constant dense<0.000000e+00> : vector<1x384xf32>
    %139 = tpu.matmul %138, %20, %cst_37 {dimension_numbers = #tpu.dot_dimension_numbers<[1], [0], [0], [1], [0, 0, 1, 1], [], []>} : vector<1x128xf32>, vector<128x384xf32>, vector<1x384xf32> -> vector<1x384xf32>
    %140 = vector.extract_strided_slice %25 {offsets = [5, 0], sizes = [1, 256], strides = [1, 1]} : vector<8x256xf32> to vector<1x256xf32>
    %141 = vector.extract_strided_slice %139 {offsets = [0, 0], sizes = [1, 256], strides = [1, 1]} : vector<1x384xf32> to vector<1x256xf32>
    %142 = arith.addf %140, %141 : vector<1x256xf32>
    %143 = arith.negf %142 : vector<1x256xf32>
    %144 = math.exp %143 : vector<1x256xf32>
    %cst_38 = arith.constant 1.000000e+00 : f32
    %145 = vector.broadcast %cst_38 : f32 to vector<1x256xf32>
    %146 = arith.addf %145, %144 : vector<1x256xf32>
    %147 = arith.divf %145, %146 : vector<1x256xf32>
    %148 = vector.extract_strided_slice %147 {offsets = [0, 0], sizes = [1, 128], strides = [1, 1]} : vector<1x256xf32> to vector<1x128xf32>
    %149 = vector.extract_strided_slice %147 {offsets = [0, 128], sizes = [1, 128], strides = [1, 1]} : vector<1x256xf32> to vector<1x128xf32>
    %150 = vector.extract_strided_slice %26 {offsets = [5, 0], sizes = [1, 128], strides = [1, 1]} : vector<8x128xf32> to vector<1x128xf32>
    %151 = vector.extract_strided_slice %139 {offsets = [0, 256], sizes = [1, 128], strides = [1, 1]} : vector<1x384xf32> to vector<1x128xf32>
    %152 = arith.addf %151, %27 : vector<1x128xf32>
    %153 = arith.mulf %148, %152 : vector<1x128xf32>
    %154 = arith.addf %150, %153 : vector<1x128xf32>
    %155 = math.tanh %154 : vector<1x128xf32>
    %cst_39 = arith.constant 1.000000e+00 : f32
    %156 = vector.broadcast %cst_39 : f32 to vector<1x128xf32>
    %157 = arith.subf %156, %149 : vector<1x128xf32>
    %158 = arith.mulf %157, %155 : vector<1x128xf32>
    %159 = arith.mulf %149, %138 : vector<1x128xf32>
    %160 = arith.addf %158, %159 : vector<1x128xf32>
    %cst_40 = arith.constant dense<0.000000e+00> : vector<1x384xf32>
    %161 = tpu.matmul %160, %20, %cst_40 {dimension_numbers = #tpu.dot_dimension_numbers<[1], [0], [0], [1], [0, 0, 1, 1], [], []>} : vector<1x128xf32>, vector<128x384xf32>, vector<1x384xf32> -> vector<1x384xf32>
    %162 = vector.extract_strided_slice %25 {offsets = [6, 0], sizes = [1, 256], strides = [1, 1]} : vector<8x256xf32> to vector<1x256xf32>
    %163 = vector.extract_strided_slice %161 {offsets = [0, 0], sizes = [1, 256], strides = [1, 1]} : vector<1x384xf32> to vector<1x256xf32>
    %164 = arith.addf %162, %163 : vector<1x256xf32>
    %165 = arith.negf %164 : vector<1x256xf32>
    %166 = math.exp %165 : vector<1x256xf32>
    %cst_41 = arith.constant 1.000000e+00 : f32
    %167 = vector.broadcast %cst_41 : f32 to vector<1x256xf32>
    %168 = arith.addf %167, %166 : vector<1x256xf32>
    %169 = arith.divf %167, %168 : vector<1x256xf32>
    %170 = vector.extract_strided_slice %169 {offsets = [0, 0], sizes = [1, 128], strides = [1, 1]} : vector<1x256xf32> to vector<1x128xf32>
    %171 = vector.extract_strided_slice %169 {offsets = [0, 128], sizes = [1, 128], strides = [1, 1]} : vector<1x256xf32> to vector<1x128xf32>
    %172 = vector.extract_strided_slice %26 {offsets = [6, 0], sizes = [1, 128], strides = [1, 1]} : vector<8x128xf32> to vector<1x128xf32>
    %173 = vector.extract_strided_slice %161 {offsets = [0, 256], sizes = [1, 128], strides = [1, 1]} : vector<1x384xf32> to vector<1x128xf32>
    %174 = arith.addf %173, %27 : vector<1x128xf32>
    %175 = arith.mulf %170, %174 : vector<1x128xf32>
    %176 = arith.addf %172, %175 : vector<1x128xf32>
    %177 = math.tanh %176 : vector<1x128xf32>
    %cst_42 = arith.constant 1.000000e+00 : f32
    %178 = vector.broadcast %cst_42 : f32 to vector<1x128xf32>
    %179 = arith.subf %178, %171 : vector<1x128xf32>
    %180 = arith.mulf %179, %177 : vector<1x128xf32>
    %181 = arith.mulf %171, %160 : vector<1x128xf32>
    %182 = arith.addf %180, %181 : vector<1x128xf32>
    %cst_43 = arith.constant dense<0.000000e+00> : vector<1x384xf32>
    %183 = tpu.matmul %182, %20, %cst_43 {dimension_numbers = #tpu.dot_dimension_numbers<[1], [0], [0], [1], [0, 0, 1, 1], [], []>} : vector<1x128xf32>, vector<128x384xf32>, vector<1x384xf32> -> vector<1x384xf32>
    %184 = vector.extract_strided_slice %25 {offsets = [7, 0], sizes = [1, 256], strides = [1, 1]} : vector<8x256xf32> to vector<1x256xf32>
    %185 = vector.extract_strided_slice %183 {offsets = [0, 0], sizes = [1, 256], strides = [1, 1]} : vector<1x384xf32> to vector<1x256xf32>
    %186 = arith.addf %184, %185 : vector<1x256xf32>
    %187 = arith.negf %186 : vector<1x256xf32>
    %188 = math.exp %187 : vector<1x256xf32>
    %cst_44 = arith.constant 1.000000e+00 : f32
    %189 = vector.broadcast %cst_44 : f32 to vector<1x256xf32>
    %190 = arith.addf %189, %188 : vector<1x256xf32>
    %191 = arith.divf %189, %190 : vector<1x256xf32>
    %192 = vector.extract_strided_slice %191 {offsets = [0, 0], sizes = [1, 128], strides = [1, 1]} : vector<1x256xf32> to vector<1x128xf32>
    %193 = vector.extract_strided_slice %191 {offsets = [0, 128], sizes = [1, 128], strides = [1, 1]} : vector<1x256xf32> to vector<1x128xf32>
    %194 = vector.extract_strided_slice %26 {offsets = [7, 0], sizes = [1, 128], strides = [1, 1]} : vector<8x128xf32> to vector<1x128xf32>
    %195 = vector.extract_strided_slice %183 {offsets = [0, 256], sizes = [1, 128], strides = [1, 1]} : vector<1x384xf32> to vector<1x128xf32>
    %196 = arith.addf %195, %27 : vector<1x128xf32>
    %197 = arith.mulf %192, %196 : vector<1x128xf32>
    %198 = arith.addf %194, %197 : vector<1x128xf32>
    %199 = math.tanh %198 : vector<1x128xf32>
    %cst_45 = arith.constant 1.000000e+00 : f32
    %200 = vector.broadcast %cst_45 : f32 to vector<1x128xf32>
    %201 = arith.subf %200, %193 : vector<1x128xf32>
    %202 = arith.mulf %201, %199 : vector<1x128xf32>
    %203 = arith.mulf %193, %182 : vector<1x128xf32>
    %204 = arith.addf %202, %203 : vector<1x128xf32>
    %205 = tpu.concatenate %50, %72, %94, %116, %138, %160, %182, %204 in 0 : vector<1x128xf32>, vector<1x128xf32>, vector<1x128xf32>, vector<1x128xf32>, vector<1x128xf32>, vector<1x128xf32>, vector<1x128xf32>, vector<1x128xf32> -> vector<8x128xf32>
    %c0_46 = arith.constant 0 : index
    %c0_47 = arith.constant 0 : index
    %206 = vector.load %arg9[%c0_46, %c0_47] : memref<128x128xf32, #tpu.memory_space<vmem>>, vector<128x128xf32>
    %cst_48 = arith.constant dense<0.000000e+00> : vector<8x128xf32>
    %207 = tpu.matmul %205, %206, %cst_48 {dimension_numbers = #tpu.dot_dimension_numbers<[1], [0], [0], [1], [0, 0, 1, 1], [], []>} : vector<8x128xf32>, vector<128x128xf32>, vector<8x128xf32> -> vector<8x128xf32>
    %c0_49 = arith.constant 0 : index
    %c0_50 = arith.constant 0 : index
    %208 = vector.load %arg10[%c0_49, %c0_50] : memref<1x128xf32, #tpu.memory_space<vmem>>, vector<1x128xf32>
    %209 = vector.broadcast %208 : vector<1x128xf32> to vector<8x128xf32>
    %210 = arith.addf %207, %209 : vector<8x128xf32>
    %211 = tpu.iota {dimensions = array<i32: 1>} : vector<8x128xi32>
    %c64_i32 = arith.constant 64 : i32
    %212 = vector.broadcast %c64_i32 : i32 to vector<8x128xi32>
    %213 = arith.cmpi slt, %211, %212 : vector<8x128xi32>
    %cst_51 = arith.constant 0xFF800000 : f32
    %214 = vector.broadcast %cst_51 : f32 to vector<8x128xf32>
    %215 = arith.select %213, %210, %214 : vector<8x128xi1>, vector<8x128xf32>
    %cst_52 = arith.constant dense<0xFF800000> : vector<8xf32>
    %216 = vector.multi_reduction <maximumf>, %215, %cst_52 [1] : vector<8x128xf32> to vector<8xf32>
    %217 = vector.shape_cast %216 : vector<8xf32> to vector<8x1xf32>
    %218 = vector.broadcast %217 : vector<8x1xf32> to vector<8x128xf32>
    %219 = arith.subf %215, %218 : vector<8x128xf32>
    %220 = math.exp %219 : vector<8x128xf32>
    %cst_53 = arith.constant dense<0.000000e+00> : vector<8xf32>
    %221 = vector.multi_reduction <add>, %220, %cst_53 [1] : vector<8x128xf32> to vector<8xf32>
    %222 = vector.shape_cast %221 : vector<8xf32> to vector<8x1xf32>
    %223 = tpu.reciprocal %222 : vector<8x1xf32> -> vector<8x1xf32>
    %224 = vector.broadcast %223 : vector<8x1xf32> to vector<8x128xf32>
    %225 = arith.mulf %220, %224 : vector<8x128xf32>
    %c64_i32_54 = arith.constant 64 : i32
    %226 = vector.broadcast %c64_i32_54 : i32 to vector<8x128xi32>
    %227 = arith.cmpi eq, %211, %226 : vector<8x128xi32>
    %cst_55 = arith.constant 0.000000e+00 : f32
    %228 = vector.broadcast %cst_55 : f32 to vector<8x128xf32>
    %229 = arith.select %227, %210, %228 : vector<8x128xi1>, vector<8x128xf32>
    %230 = arith.addf %225, %229 : vector<8x128xf32>
    %c0_56 = arith.constant 0 : index
    %c0_57 = arith.constant 0 : index
    %231 = vector.load %arg11[%c0_56, %c0_57] : memref<8x128xf32, #tpu.memory_space<vmem>>, vector<8x128xf32>
    tpu.vector_store %arg11[%c0_56, %c0_57], %230 {strides = array<i32>} : memref<8x128xf32, #tpu.memory_space<vmem>>, vector<8x128xf32>,
    return
  }
}

</mosaic_0001>

<llo_original>
// kernel: jassnet_forward.1
$region0: #{jassnet_forward.1}
  #allocation0 [shape = 'u32[]', space=smem, size = 0x4, offset = 0x4, fixed_abs, tag = 'smem constant byte address 0x4 - core index']
  #allocation1 [shape = 'u32[144,128]{1,0:T(1,128)}', space=vmem, size = 0x12000, scoped, tag = 'internal scratch']
  %s0 = inlined_call_operand.vmem [shape: f32[8,64], index: 0, kind: input, shape index: {}]
  %s1 = inlined_call_operand.vmem [shape: f32[64,512], index: 1, kind: input, shape index: {}]
  %s2 = inlined_call_operand.vmem [shape: f32[1,512], index: 2, kind: input, shape index: {}]
  %s3 = inlined_call_operand.vmem [shape: f32[512,256], index: 3, kind: input, shape index: {}]
  %s4 = inlined_call_operand.vmem [shape: f32[1,256], index: 4, kind: input, shape index: {}]
  %s5 = inlined_call_operand.vmem [shape: f32[256,384], index: 5, kind: input, shape index: {}]
  %s6 = inlined_call_operand.vmem [shape: f32[1,384], index: 6, kind: input, shape index: {}]
  %s7 = inlined_call_operand.vmem [shape: f32[128,384], index: 7, kind: input, shape index: {}]
  %s8 = inlined_call_operand.vmem [shape: f32[1,384], index: 8, kind: input, shape index: {}]
  %s9 = inlined_call_operand.vmem [shape: f32[128,128], index: 9, kind: input, shape index: {}]
  %s10 = inlined_call_operand.vmem [shape: f32[1,128], index: 10, kind: input, shape index: {}]
  %s11 = inlined_call_operand.vmem [shape: f32[8,128], index: 11, kind: output, shape index: {}]
  %s12 = sld [smem:[#allocation0]]
  $region54: #{jassnet_forward.1} parent=0
    _
  %s14 = ssub.s32 1, %s12
  %s15 = scalar_select 0, %s14, %s12
  // Predicated region
  $region2: #{jassnet_forward.1} parent=0 // pred_check
    _
  $region3: #{jassnet_forward.1} parent=0 // pred_check_branch
    %17 = sbr.rel (0) target = $region5
  $region4: #{jassnet_forward.1} parent=0 // pred_region
    _
  $region5: #{jassnet_forward.1} parent=0 // pred_fallthru
    _
  // Predicated region
  $region6: #{jassnet_forward.1} parent=0 // pred_check
    _
  $region7: #{jassnet_forward.1} parent=0 // pred_check_branch
    %19 = sbr.rel (0) target = $region9
  $region8: #{jassnet_forward.1} parent=0 // pred_region
    _
  $region9: #{jassnet_forward.1} parent=0 // pred_fallthru
    _
  // Predicated region
  $region10: #{jassnet_forward.1} parent=0 // pred_check
    _
  $region11: #{jassnet_forward.1} parent=0 // pred_check_branch
    %21 = sbr.rel (0) target = $region13
  $region12: #{jassnet_forward.1} parent=0 // pred_region
    _
  $region13: #{jassnet_forward.1} parent=0 // pred_fallthru
    _
  // Predicated region
  $region14: #{jassnet_forward.1} parent=0 // pred_check
    _
  $region15: #{jassnet_forward.1} parent=0 // pred_check_branch
    %23 = sbr.rel (0) target = $region17
  $region16: #{jassnet_forward.1} parent=0 // pred_region
    _
  $region17: #{jassnet_forward.1} parent=0 // pred_fallthru
    _
  // Predicated region
  $region18: #{jassnet_forward.1} parent=0 // pred_check
    _
  $region19: #{jassnet_forward.1} parent=0 // pred_check_branch
    %25 = sbr.rel (0) target = $region21
  $region20: #{jassnet_forward.1} parent=0 // pred_region
    _
  $region21: #{jassnet_forward.1} parent=0 // pred_fallthru
    _
  // Predicated region
  $region22: #{jassnet_forward.1} parent=0 // pred_check
    _
  $region23: #{jassnet_forward.1} parent=0 // pred_check_branch
    %27 = sbr.rel (0) target = $region25
  $region24: #{jassnet_forward.1} parent=0 // pred_region
    _
  $region25: #{jassnet_forward.1} parent=0 // pred_fallthru
    _
  // Predicated region
  $region26: #{jassnet_forward.1} parent=0 // pred_check
    _
  $region27: #{jassnet_forward.1} parent=0 // pred_check_branch
    %29 = sbr.rel (0) target = $region29
  $region28: #{jassnet_forward.1} parent=0 // pred_region
    _
  $region29: #{jassnet_forward.1} parent=0 // pred_fallthru
    _
  // Predicated region
  $region30: #{jassnet_forward.1} parent=0 // pred_check
    _
  $region31: #{jassnet_forward.1} parent=0 // pred_check_branch
    %31 = sbr.rel (0) target = $region33
  $region32: #{jassnet_forward.1} parent=0 // pred_region
    _
  $region33: #{jassnet_forward.1} parent=0 // pred_fallthru
    _
  // Predicated region
  $region34: #{jassnet_forward.1} parent=0 // pred_check
    _
  $region35: #{jassnet_forward.1} parent=0 // pred_check_branch
    %33 = sbr.rel (0) target = $region37
  $region36: #{jassnet_forward.1} parent=0 // pred_region
    _
  $region37: #{jassnet_forward.1} parent=0 // pred_fallthru
    _
  // Predicated region
  $region38: #{jassnet_forward.1} parent=0 // pred_check
    _
  $region39: #{jassnet_forward.1} parent=0 // pred_check_branch
    %35 = sbr.rel (0) target = $region41
  $region40: #{jassnet_forward.1} parent=0 // pred_region
    _
  $region41: #{jassnet_forward.1} parent=0 // pred_fallthru
    _
  // Predicated region
  $region42: #{jassnet_forward.1} parent=0 // pred_check
    _
  $region43: #{jassnet_forward.1} parent=0 // pred_check_branch
    %37 = sbr.rel (0) target = $region45
  $region44: #{jassnet_forward.1} parent=0 // pred_region
    _
  $region45: #{jassnet_forward.1} parent=0 // pred_fallthru
    _
  %v38 = vld [vmem:[%s0] sm:$0xff]
  %v39 = vld [vmem:[%s1] sm:$0xff]
  %v40 = vld [vmem:[%s1 + $0x8] sm:$0xff]
  %v41 = vld [vmem:[%s1 + $0x10] sm:$0xff]
  %v42 = vld [vmem:[%s1 + $0x18] sm:$0xff]
  %v43 = vld [vmem:[%s1 + $0x20] sm:$0xff]
  %v44 = vld [vmem:[%s1 + $0x28] sm:$0xff]
  %v45 = vld [vmem:[%s1 + $0x30] sm:$0xff]
  %v46 = vld [vmem:[%s1 + $0x38] sm:$0xff]
  %v47 = vld [vmem:[%s1 + $0x40] sm:$0xff]
  %v48 = vld [vmem:[%s1 + $0x48] sm:$0xff]
  %v49 = vld [vmem:[%s1 + $0x50] sm:$0xff]
  %v50 = vld [vmem:[%s1 + $0x58] sm:$0xff]
  %v51 = vld [vmem:[%s1 + $0x60] sm:$0xff]
  %v52 = vld [vmem:[%s1 + $0x68] sm:$0xff]
  %v53 = vld [vmem:[%s1 + $0x70] sm:$0xff]
  %v54 = vld [vmem:[%s1 + $0x78] sm:$0xff]
  %v55 = vld [vmem:[%s1 + $0x80] sm:$0xff]
  %v56 = vld [vmem:[%s1 + $0x88] sm:$0xff]
  %v57 = vld [vmem:[%s1 + $0x90] sm:$0xff]
  %v58 = vld [vmem:[%s1 + $0x98] sm:$0xff]
  %v59 = vld [vmem:[%s1 + $0xa0] sm:$0xff]
  %v60 = vld [vmem:[%s1 + $0xa8] sm:$0xff]
  %v61 = vld [vmem:[%s1 + $0xb0] sm:$0xff]
  %v62 = vld [vmem:[%s1 + $0xb8] sm:$0xff]
  %v63 = vld [vmem:[%s1 + $0xc0] sm:$0xff]
  %v64 = vld [vmem:[%s1 + $0xc8] sm:$0xff]
  %v65 = vld [vmem:[%s1 + $0xd0] sm:$0xff]
  %v66 = vld [vmem:[%s1 + $0xd8] sm:$0xff]
  %v67 = vld [vmem:[%s1 + $0xe0] sm:$0xff]
  %v68 = vld [vmem:[%s1 + $0xe8] sm:$0xff]
  %v69 = vld [vmem:[%s1 + $0xf0] sm:$0xff]
  %v70 = vld [vmem:[%s1 + $0xf8] sm:$0xff]
  %v71 = vld [vmem:[%s2] sm:$0xf]
  %v73 = vlaneseq
  %v74 = vshrl.u32 %v73, 7
  %v75 = vsub.s32 0, %v74
  %v76 = vrot.slane %v71, %v75
  %v77 = vlaneseq
  %v78 = vshrl.u32 %v77, 7
  %v79 = vsub.s32 1, %v78
  %v80 = vrot.slane %v71, %v79
  %v81 = vlaneseq
  %v82 = vshrl.u32 %v81, 7
  %v83 = vsub.s32 2, %v82
  %v84 = vrot.slane %v71, %v83
  %v85 = vlaneseq
  %v86 = vshrl.u32 %v85, 7
  %v87 = vsub.s32 3, %v86
  %v88 = vrot.slane %v71, %v87
  %vm93 = vcmask 523264
  %v95 = vsel %vm93, %v38, 0
  %97 = vmatprep.subr.mxu0 %v40
  %98 = vmatpush1.msra.mxu0 %v39
  %99 = vmatprep.subr.mxu0 %v44
  %100 = vmatpush1.msra.mxu0 %v43
  %101 = vmatprep.subr.mxu0 %v48
  %102 = vmatpush1.msra.mxu0 %v47
  %103 = vmatprep.subr.mxu0 %v52
  %104 = vmatpush1.msra.mxu0 %v51
  %105 = vmatprep.subr.mxu0 %v56
  %106 = vmatpush1.msra.mxu0 %v55
  %107 = vmatprep.subr.mxu0 %v60
  %108 = vmatpush1.msra.mxu0 %v59
  %109 = vmatprep.subr.mxu0 %v64
  %110 = vmatpush1.msra.mxu0 %v63
  %111 = vmatprep.subr.mxu0 %v68
  %112 = vmatpush1.msra.mxu0 %v67
  %113 = vmatprep.subr.mxu0 0.0
  %114 = vmatpush1.msra.mxu0 0.0
  %115 = vmatprep.subr.mxu0 0.0
  %116 = vmatpush1.msra.mxu0 0.0
  %117 = vmatprep.subr.mxu0 0.0
  %118 = vmatpush1.msra.mxu0 0.0
  %119 = vmatprep.subr.mxu0 0.0
  %120 = vmatpush1.msra.mxu0 0.0
  %121 = vmatprep.subr.mxu0 0.0
  %122 = vmatpush1.msra.mxu0 0.0
  %123 = vmatprep.subr.mxu0 0.0
  %124 = vmatpush1.msra.mxu0 0.0
  %125 = vmatprep.subr.mxu0 0.0
  %126 = vmatpush1.msra.mxu0 0.0
  %127 = vmatprep.subr.mxu0 0.0
  %128 = vmatpush1.msra.mxu0 0.0
  %129 = vmatprep.subr.mxu0 0.0
  %130 = vmatpush1.msra.mxu0 0.0
  %131 = vmatprep.subr.mxu0 0.0
  %132 = vmatpush1.msra.mxu0 0.0
  %133 = vmatprep.subr.mxu0 0.0
  %134 = vmatpush1.msra.mxu0 0.0
  %135 = vmatprep.subr.mxu0 0.0
  %136 = vmatpush1.msra.mxu0 0.0
  %137 = vmatprep.subr.mxu0 0.0
  %138 = vmatpush1.msra.mxu0 0.0
  %139 = vmatprep.subr.mxu0 0.0
  %140 = vmatpush1.msra.mxu0 0.0
  %141 = vmatprep.subr.mxu0 0.0
  %142 = vmatpush1.msra.mxu0 0.0
  %143 = vmatprep.subr.mxu0 0.0
  %144 = vmatpush1.msra.mxu0 0.0
  %145 = vmatprep.subr.mxu0 0.0
  %146 = vmatpush1.msra.mxu0 0.0
  %147 = vmatprep.subr.mxu0 0.0
  %148 = vmatpush1.msra.mxu0 0.0
  %149 = vmatprep.subr.mxu0 0.0
  %150 = vmatpush1.msra.mxu0 0.0
  %151 = vmatprep.subr.mxu0 0.0
  %152 = vmatpush1.msra.mxu0 0.0
  %153 = vmatprep.subr.mxu0 0.0
  %154 = vmatpush1.msra.mxu0 0.0
  %155 = vmatprep.subr.mxu0 0.0
  %156 = vmatpush1.msra.mxu0 0.0
  %157 = vmatprep.subr.mxu0 0.0
  %158 = vmatpush1.msra.mxu0 0.0
  %159 = vmatprep.subr.mxu0 0.0
  %160 = vmatpush1.msra.mxu0 0.0
  %161 = vmatprep.mubr.f32.mxu0 0.0
  %162 = vmatmul.mubr.f32.gmra.mrb[0].mxu0 %v95
  %v163 = vpop.f32.mrb[0].mxu0
  %v164 = vadd.f32 %v76, %v163
  %v165 = vpop.f32.mrb[0].mxu0
  %v166 = vadd.f32 %v80, %v165
  %167 = vdwg.mxu0
  %168 = vmatprep.subr.mxu0 %v42
  %169 = vmatpush1.msra.mxu0 %v41
  %170 = vmatprep.subr.mxu0 %v46
  %171 = vmatpush1.msra.mxu0 %v45
  %172 = vmatprep.subr.mxu0 %v50
  %173 = vmatpush1.msra.mxu0 %v49
  %174 = vmatprep.subr.mxu0 %v54
  %175 = vmatpush1.msra.mxu0 %v53
  %176 = vmatprep.subr.mxu0 %v58
  %177 = vmatpush1.msra.mxu0 %v57
  %178 = vmatprep.subr.mxu0 %v62
  %179 = vmatpush1.msra.mxu0 %v61
  %180 = vmatprep.subr.mxu0 %v66
  %181 = vmatpush1.msra.mxu0 %v65
  %182 = vmatprep.subr.mxu0 %v70
  %183 = vmatpush1.msra.mxu0 %v69
  %184 = vmatprep.subr.mxu0 0.0
  %185 = vmatpush1.msra.mxu0 0.0
  %186 = vmatprep.subr.mxu0 0.0
  %187 = vmatpush1.msra.mxu0 0.0
  %188 = vmatprep.subr.mxu0 0.0
  %189 = vmatpush1.msra.mxu0 0.0
  %190 = vmatprep.subr.mxu0 0.0
  %191 = vmatpush1.msra.mxu0 0.0
  %192 = vmatprep.subr.mxu0 0.0
  %193 = vmatpush1.msra.mxu0 0.0
  %194 = vmatprep.subr.mxu0 0.0
  %195 = vmatpush1.msra.mxu0 0.0
  %196 = vmatprep.subr.mxu0 0.0
  %197 = vmatpush1.msra.mxu0 0.0
  %198 = vmatprep.subr.mxu0 0.0
  %199 = vmatpush1.msra.mxu0 0.0
  %200 = vmatprep.subr.mxu0 0.0
  %201 = vmatpush1.msra.mxu0 0.0
  %202 = vmatprep.subr.mxu0 0.0
  %203 = vmatpush1.msra.mxu0 0.0
  %204 = vmatprep.subr.mxu0 0.0
  %205 = vmatpush1.msra.mxu0 0.0
  %206 = vmatprep.subr.mxu0 0.0
  %207 = vmatpush1.msra.mxu0 0.0
  %208 = vmatprep.subr.mxu0 0.0
  %209 = vmatpush1.msra.mxu0 0.0
  %210 = vmatprep.subr.mxu0 0.0
  %211 = vmatpush1.msra.mxu0 0.0
  %212 = vmatprep.subr.mxu0 0.0
  %213 = vmatpush1.msra.mxu0 0.0
  %214 = vmatprep.subr.mxu0 0.0
  %215 = vmatpush1.msra.mxu0 0.0
  %216 = vmatprep.subr.mxu0 0.0
  %217 = vmatpush1.msra.mxu0 0.0
  %218 = vmatprep.subr.mxu0 0.0
  %219 = vmatpush1.msra.mxu0 0.0
  %220 = vmatprep.subr.mxu0 0.0
  %221 = vmatpush1.msra.mxu0 0.0
  %222 = vmatprep.subr.mxu0 0.0
  %223 = vmatpush1.msra.mxu0 0.0
  %224 = vmatprep.subr.mxu0 0.0
  %225 = vmatpush1.msra.mxu0 0.0
  %226 = vmatprep.subr.mxu0 0.0
  %227 = vmatpush1.msra.mxu0 0.0
  %228 = vmatprep.subr.mxu0 0.0
  %229 = vmatpush1.msra.mxu0 0.0
  %230 = vmatprep.subr.mxu0 0.0
  %231 = vmatpush1.msra.mxu0 0.0
  %232 = vmatprep.mubr.f32.mxu0 0.0
  %233 = vmatmul.mubr.f32.gmra.mrb[0].mxu0 %v95
  %v234 = vpop.f32.mrb[0].mxu0
  %v235 = vadd.f32 %v84, %v234
  %v236 = vpop.f32.mrb[0].mxu0
  %v237 = vadd.f32 %v88, %v236
  %238 = vdwg.mxu0
  %v239 = vmax.f32 %v164, 0.0
  %v240 = vmax.f32 %v166, 0.0
  %v241 = vmax.f32 %v235, 0.0
  %v242 = vmax.f32 %v237, 0.0
  %v243 = vld [vmem:[%s3] sm:$0xff]
  %v244 = vld [vmem:[%s3 + $0x8] sm:$0xff]
  %v245 = vld [vmem:[%s3 + $0x10] sm:$0xff]
  %v246 = vld [vmem:[%s3 + $0x18] sm:$0xff]
  %v247 = vld [vmem:[%s3 + $0x20] sm:$0xff]
  %v248 = vld [vmem:[%s3 + $0x28] sm:$0xff]
  %v249 = vld [vmem:[%s3 + $0x30] sm:$0xff]
  %v250 = vld [vmem:[%s3 + $0x38] sm:$0xff]
  %v251 = vld [vmem:[%s3 + $0x40] sm:$0xff]
  %v252 = vld [vmem:[%s3 + $0x48] sm:$0xff]
  %v253 = vld [vmem:[%s3 + $0x50] sm:$0xff]
  %v254 = vld [vmem:[%s3 + $0x58] sm:$0xff]
  %v255 = vld [vmem:[%s3 + $0x60] sm:$0xff]
  %v256 = vld [vmem:[%s3 + $0x68] sm:$0xff]
  %v257 = vld [vmem:[%s3 + $0x70] sm:$0xff]
  %v258 = vld [vmem:[%s3 + $0x78] sm:$0xff]
  %v259 = vld [vmem:[%s3 + $0x80] sm:$0xff]
  %v260 = vld [vmem:[%s3 + $0x88] sm:$0xff]
  %v261 = vld [vmem:[%s3 + $0x90] sm:$0xff]
  %v262 = vld [vmem:[%s3 + $0x98] sm:$0xff]
  %v263 = vld [vmem:[%s3 + $0xa0] sm:$0xff]
  %v264 = vld [vmem:[%s3 + $0xa8] sm:$0xff]
  %v265 = vld [vmem:[%s3 + $0xb0] sm:$0xff]
  %v266 = vld [vmem:[%s3 + $0xb8] sm:$0xff]
  %v267 = vld [vmem:[%s3 + $0xc0] sm:$0xff]
  %v268 = vld [vmem:[%s3 + $0xc8] sm:$0xff]
  %v269 = vld [vmem:[%s3 + $0xd0] sm:$0xff]
  %v270 = vld [vmem:[%s3 + $0xd8] sm:$0xff]
  %v271 = vld [vmem:[%s3 + $0xe0] sm:$0xff]
  %v272 = vld [vmem:[%s3 + $0xe8] sm:$0xff]
  %v273 = vld [vmem:[%s3 + $0xf0] sm:$0xff]
  %v274 = vld [vmem:[%s3 + $0xf8] sm:$0xff]
  %v275 = vld [vmem:[%s3 + $0x100] sm:$0xff]
  %v276 = vld [vmem:[%s3 + $0x108] sm:$0xff]
  %v277 = vld [vmem:[%s3 + $0x110] sm:$0xff]
  %v278 = vld [vmem:[%s3 + $0x118] sm:$0xff]
  %v279 = vld [vmem:[%s3 + $0x120] sm:$0xff]
  %v280 = vld [vmem:[%s3 + $0x128] sm:$0xff]
  %v281 = vld [vmem:[%s3 + $0x130] sm:$0xff]
  %v282 = vld [vmem:[%s3 + $0x138] sm:$0xff]
  %v283 = vld [vmem:[%s3 + $0x140] sm:$0xff]
  %v284 = vld [vmem:[%s3 + $0x148] sm:$0xff]
  %v285 = vld [vmem:[%s3 + $0x150] sm:$0xff]
  %v286 = vld [vmem:[%s3 + $0x158] sm:$0xff]
  %v287 = vld [vmem:[%s3 + $0x160] sm:$0xff]
  %v288 = vld [vmem:[%s3 + $0x168] sm:$0xff]
  %v289 = vld [vmem:[%s3 + $0x170] sm:$0xff]
  %v290 = vld [vmem:[%s3 + $0x178] sm:$0xff]
  %v291 = vld [vmem:[%s3 + $0x180] sm:$0xff]
  %v292 = vld [vmem:[%s3 + $0x188] sm:$0xff]
  %v293 = vld [vmem:[%s3 + $0x190] sm:$0xff]
  %v294 = vld [vmem:[%s3 + $0x198] sm:$0xff]
  %v295 = vld [vmem:[%s3 + $0x1a0] sm:$0xff]
  %v296 = vld [vmem:[%s3 + $0x1a8] sm:$0xff]
  %v297 = vld [vmem:[%s3 + $0x1b0] sm:$0xff]
  %v298 = vld [vmem:[%s3 + $0x1b8] sm:$0xff]
  %v299 = vld [vmem:[%s3 + $0x1c0] sm:$0xff]
  %v300 = vld [vmem:[%s3 + $0x1c8] sm:$0xff]
  %v301 = vld [vmem:[%s3 + $0x1d0] sm:$0xff]
  %v302 = vld [vmem:[%s3 + $0x1d8] sm:$0xff]
  %v303 = vld [vmem:[%s3 + $0x1e0] sm:$0xff]
  %v304 = vld [vmem:[%s3 + $0x1e8] sm:$0xff]
  %v305 = vld [vmem:[%s3 + $0x1f0] sm:$0xff]
  %v306 = vld [vmem:[%s3 + $0x1f8] sm:$0xff]
  %v307 = vld [vmem:[%s3 + $0x200] sm:$0xff]
  %v308 = vld [vmem:[%s3 + $0x208] sm:$0xff]
  %v309 = vld [vmem:[%s3 + $0x210] sm:$0xff]
  %v310 = vld [vmem:[%s3 + $0x218] sm:$0xff]
  %v311 = vld [vmem:[%s3 + $0x220] sm:$0xff]
  %v312 = vld [vmem:[%s3 + $0x228] sm:$0xff]
  %v313 = vld [vmem:[%s3 + $0x230] sm:$0xff]
  %v314 = vld [vmem:[%s3 + $0x238] sm:$0xff]
  %v315 = vld [vmem:[%s3 + $0x240] sm:$0xff]
  %v316 = vld [vmem:[%s3 + $0x248] sm:$0xff]
  %v317 = vld [vmem:[%s3 + $0x250] sm:$0xff]
  %v318 = vld [vmem:[%s3 + $0x258] sm:$0xff]
  %v319 = vld [vmem:[%s3 + $0x260] sm:$0xff]
  %v320 = vld [vmem:[%s3 + $0x268] sm:$0xff]
  %v321 = vld [vmem:[%s3 + $0x270] sm:$0xff]
  %v322 = vld [vmem:[%s3 + $0x278] sm:$0xff]
  %v323 = vld [vmem:[%s3 + $0x280] sm:$0xff]
  %v324 = vld [vmem:[%s3 + $0x288] sm:$0xff]
  %v325 = vld [vmem:[%s3 + $0x290] sm:$0xff]
  %v326 = vld [vmem:[%s3 + $0x298] sm:$0xff]
  %v327 = vld [vmem:[%s3 + $0x2a0] sm:$0xff]
  %v328 = vld [vmem:[%s3 + $0x2a8] sm:$0xff]
  %v329 = vld [vmem:[%s3 + $0x2b0] sm:$0xff]
  %v330 = vld [vmem:[%s3 + $0x2b8] sm:$0xff]
  %v331 = vld [vmem:[%s3 + $0x2c0] sm:$0xff]
  %v332 = vld [vmem:[%s3 + $0x2c8] sm:$0xff]
  %v333 = vld [vmem:[%s3 + $0x2d0] sm:$0xff]
  %v334 = vld [vmem:[%s3 + $0x2d8] sm:$0xff]
  %v335 = vld [vmem:[%s3 + $0x2e0] sm:$0xff]
  %v336 = vld [vmem:[%s3 + $0x2e8] sm:$0xff]
  %v337 = vld [vmem:[%s3 + $0x2f0] sm:$0xff]
  %v338 = vld [vmem:[%s3 + $0x2f8] sm:$0xff]
  %v339 = vld [vmem:[%s3 + $0x300] sm:$0xff]
  %v340 = vld [vmem:[%s3 + $0x308] sm:$0xff]
  %v341 = vld [vmem:[%s3 + $0x310] sm:$0xff]
  %v342 = vld [vmem:[%s3 + $0x318] sm:$0xff]
  %v343 = vld [vmem:[%s3 + $0x320] sm:$0xff]
  %v344 = vld [vmem:[%s3 + $0x328] sm:$0xff]
  %v345 = vld [vmem:[%s3 + $0x330] sm:$0xff]
  %v346 = vld [vmem:[%s3 + $0x338] sm:$0xff]
  %v347 = vld [vmem:[%s3 + $0x340] sm:$0xff]
  %v348 = vld [vmem:[%s3 + $0x348] sm:$0xff]
  %v349 = vld [vmem:[%s3 + $0x350] sm:$0xff]
  %v350 = vld [vmem:[%s3 + $0x358] sm:$0xff]
  %v351 = vld [vmem:[%s3 + $0x360] sm:$0xff]
  %v352 = vld [vmem:[%s3 + $0x368] sm:$0xff]
  %v353 = vld [vmem:[%s3 + $0x370] sm:$0xff]
  %v354 = vld [vmem:[%s3 + $0x378] sm:$0xff]
  %v355 = vld [vmem:[%s3 + $0x380] sm:$0xff]
  %v356 = vld [vmem:[%s3 + $0x388] sm:$0xff]
  %v357 = vld [vmem:[%s3 + $0x390] sm:$0xff]
  %v358 = vld [vmem:[%s3 + $0x398] sm:$0xff]
  %v359 = vld [vmem:[%s3 + $0x3a0] sm:$0xff]
  %v360 = vld [vmem:[%s3 + $0x3a8] sm:$0xff]
  %v361 = vld [vmem:[%s3 + $0x3b0] sm:$0xff]
  %v362 = vld [vmem:[%s3 + $0x3b8] sm:$0xff]
  %v363 = vld [vmem:[%s3 + $0x3c0] sm:$0xff]
  %v364 = vld [vmem:[%s3 + $0x3c8] sm:$0xff]
  %v365 = vld [vmem:[%s3 + $0x3d0] sm:$0xff]
  %v366 = vld [vmem:[%s3 + $0x3d8] sm:$0xff]
  %v367 = vld [vmem:[%s3 + $0x3e0] sm:$0xff]
  %v368 = vld [vmem:[%s3 + $0x3e8] sm:$0xff]
  %v369 = vld [vmem:[%s3 + $0x3f0] sm:$0xff]
  %v370 = vld [vmem:[%s3 + $0x3f8] sm:$0xff]
  %v371 = vld [vmem:[%s4] sm:$0x3]
  %v373 = vlaneseq
  %v374 = vshrl.u32 %v373, 7
  %v375 = vsub.s32 0, %v374
  %v376 = vrot.slane %v371, %v375
  %v377 = vlaneseq
  %v378 = vshrl.u32 %v377, 7
  %v379 = vsub.s32 1, %v378
  %v380 = vrot.slane %v371, %v379
  %383 = vmatprep.subr.mxu0 %v244
  %384 = vmatpush1.msra.mxu0 %v243
  %385 = vmatprep.subr.mxu0 %v246
  %386 = vmatpush1.msra.mxu0 %v245
  %387 = vmatprep.subr.mxu0 %v248
  %388 = vmatpush1.msra.mxu0 %v247
  %389 = vmatprep.subr.mxu0 %v250
  %390 = vmatpush1.msra.mxu0 %v249
  %391 = vmatprep.subr.mxu0 %v252
  %392 = vmatpush1.msra.mxu0 %v251
  %393 = vmatprep.subr.mxu0 %v254
  %394 = vmatpush1.msra.mxu0 %v253
  %395 = vmatprep.subr.mxu0 %v256
  %396 = vmatpush1.msra.mxu0 %v255
  %397 = vmatprep.subr.mxu0 %v258
  %398 = vmatpush1.msra.mxu0 %v257
  %399 = vmatprep.subr.mxu0 %v260
  %400 = vmatpush1.msra.mxu0 %v259
  %401 = vmatprep.subr.mxu0 %v262
  %402 = vmatpush1.msra.mxu0 %v261
  %403 = vmatprep.subr.mxu0 %v264
  %404 = vmatpush1.msra.mxu0 %v263
  %405 = vmatprep.subr.mxu0 %v266
  %406 = vmatpush1.msra.mxu0 %v265
  %407 = vmatprep.subr.mxu0 %v268
  %408 = vmatpush1.msra.mxu0 %v267
  %409 = vmatprep.subr.mxu0 %v270
  %410 = vmatpush1.msra.mxu0 %v269
  %411 = vmatprep.subr.mxu0 %v272
  %412 = vmatpush1.msra.mxu0 %v271
  %413 = vmatprep.subr.mxu0 %v274
  %414 = vmatpush1.msra.mxu0 %v273
  %415 = vmatprep.subr.mxu0 %v276
  %416 = vmatpush1.msra.mxu0 %v275
  %417 = vmatprep.subr.mxu0 %v278
  %418 = vmatpush1.msra.mxu0 %v277
  %419 = vmatprep.subr.mxu0 %v280
  %420 = vmatpush1.msra.mxu0 %v279
  %421 = vmatprep.subr.mxu0 %v282
  %422 = vmatpush1.msra.mxu0 %v281
  %423 = vmatprep.subr.mxu0 %v284
  %424 = vmatpush1.msra.mxu0 %v283
  %425 = vmatprep.subr.mxu0 %v286
  %426 = vmatpush1.msra.mxu0 %v285
  %427 = vmatprep.subr.mxu0 %v288
  %428 = vmatpush1.msra.mxu0 %v287
  %429 = vmatprep.subr.mxu0 %v290
  %430 = vmatpush1.msra.mxu0 %v289
  %431 = vmatprep.subr.mxu0 %v292
  %432 = vmatpush1.msra.mxu0 %v291
  %433 = vmatprep.subr.mxu0 %v294
  %434 = vmatpush1.msra.mxu0 %v293
  %435 = vmatprep.subr.mxu0 %v296
  %436 = vmatpush1.msra.mxu0 %v295
  %437 = vmatprep.subr.mxu0 %v298
  %438 = vmatpush1.msra.mxu0 %v297
  %439 = vmatprep.subr.mxu0 %v300
  %440 = vmatpush1.msra.mxu0 %v299
  %441 = vmatprep.subr.mxu0 %v302
  %442 = vmatpush1.msra.mxu0 %v301
  %443 = vmatprep.subr.mxu0 %v304
  %444 = vmatpush1.msra.mxu0 %v303
  %445 = vmatprep.subr.mxu0 %v306
  %446 = vmatpush1.msra.mxu0 %v305
  %447 = vmatprep.mubr.f32.mxu0 %v240
  %448 = vmatmul.mubr.f32.gmra.mrb[0].mxu0 %v239
  %v449 = vpop.f32.mrb[0].mxu0
  %v450 = vadd.f32 %v376, %v449
  %v451 = vpop.f32.mrb[0].mxu0
  %v452 = vadd.f32 %v380, %v451
  %453 = vdwg.mxu0
  %454 = vmatprep.subr.mxu0 %v308
  %455 = vmatpush1.msra.mxu0 %v307
  %456 = vmatprep.subr.mxu0 %v310
  %457 = vmatpush1.msra.mxu0 %v309
  %458 = vmatprep.subr.mxu0 %v312
  %459 = vmatpush1.msra.mxu0 %v311
  %460 = vmatprep.subr.mxu0 %v314
  %461 = vmatpush1.msra.mxu0 %v313
  %462 = vmatprep.subr.mxu0 %v316
  %463 = vmatpush1.msra.mxu0 %v315
  %464 = vmatprep.subr.mxu0 %v318
  %465 = vmatpush1.msra.mxu0 %v317
  %466 = vmatprep.subr.mxu0 %v320
  %467 = vmatpush1.msra.mxu0 %v319
  %468 = vmatprep.subr.mxu0 %v322
  %469 = vmatpush1.msra.mxu0 %v321
  %470 = vmatprep.subr.mxu0 %v324
  %471 = vmatpush1.msra.mxu0 %v323
  %472 = vmatprep.subr.mxu0 %v326
  %473 = vmatpush1.msra.mxu0 %v325
  %474 = vmatprep.subr.mxu0 %v328
  %475 = vmatpush1.msra.mxu0 %v327
  %476 = vmatprep.subr.mxu0 %v330
  %477 = vmatpush1.msra.mxu0 %v329
  %478 = vmatprep.subr.mxu0 %v332
  %479 = vmatpush1.msra.mxu0 %v331
  %480 = vmatprep.subr.mxu0 %v334
  %481 = vmatpush1.msra.mxu0 %v333
  %482 = vmatprep.subr.mxu0 %v336
  %483 = vmatpush1.msra.mxu0 %v335
  %484 = vmatprep.subr.mxu0 %v338
  %485 = vmatpush1.msra.mxu0 %v337
  %486 = vmatprep.subr.mxu0 %v340
  %487 = vmatpush1.msra.mxu0 %v339
  %488 = vmatprep.subr.mxu0 %v342
  %489 = vmatpush1.msra.mxu0 %v341
  %490 = vmatprep.subr.mxu0 %v344
  %491 = vmatpush1.msra.mxu0 %v343
  %492 = vmatprep.subr.mxu0 %v346
  %493 = vmatpush1.msra.mxu0 %v345
  %494 = vmatprep.subr.mxu0 %v348
  %495 = vmatpush1.msra.mxu0 %v347
  %496 = vmatprep.subr.mxu0 %v350
  %497 = vmatpush1.msra.mxu0 %v349
  %498 = vmatprep.subr.mxu0 %v352
  %499 = vmatpush1.msra.mxu0 %v351
  %500 = vmatprep.subr.mxu0 %v354
  %501 = vmatpush1.msra.mxu0 %v353
  %502 = vmatprep.subr.mxu0 %v356
  %503 = vmatpush1.msra.mxu0 %v355
  %504 = vmatprep.subr.mxu0 %v358
  %505 = vmatpush1.msra.mxu0 %v357
  %506 = vmatprep.subr.mxu0 %v360
  %507 = vmatpush1.msra.mxu0 %v359
  %508 = vmatprep.subr.mxu0 %v362
  %509 = vmatpush1.msra.mxu0 %v361
  %510 = vmatprep.subr.mxu0 %v364
  %511 = vmatpush1.msra.mxu0 %v363
  %512 = vmatprep.subr.mxu0 %v366
  %513 = vmatpush1.msra.mxu0 %v365
  %514 = vmatprep.subr.mxu0 %v368
  %515 = vmatpush1.msra.mxu0 %v367
  %516 = vmatprep.subr.mxu0 %v370
  %517 = vmatpush1.msra.mxu0 %v369
  %518 = vmatprep.mubr.f32.mxu0 %v242
  %519 = vmatmul.mubr.f32.gmra.mrb[0].mxu0 %v241
  %v520 = vpop.f32.mrb[0].mxu0
  %v521 = vadd.f32 %v450, %v520
  %v522 = vpop.f32.mrb[0].mxu0
  %v523 = vadd.f32 %v452, %v522
  %524 = vdwg.mxu0
  %v525 = vmax.f32 %v521, 0.0
  %v526 = vmax.f32 %v523, 0.0
  %v527 = vld [vmem:[%s5] sm:$0xff]
  %v528 = vld [vmem:[%s5 + $0x8] sm:$0xff]
  %v529 = vld [vmem:[%s5 + $0x10] sm:$0xff]
  %v530 = vld [vmem:[%s5 + $0x18] sm:$0xff]
  %v531 = vld [vmem:[%s5 + $0x20] sm:$0xff]
  %v532 = vld [vmem:[%s5 + $0x28] sm:$0xff]
  %v533 = vld [vmem:[%s5 + $0x30] sm:$0xff]
  %v534 = vld [vmem:[%s5 + $0x38] sm:$0xff]
  %v535 = vld [vmem:[%s5 + $0x40] sm:$0xff]
  %v536 = vld [vmem:[%s5 + $0x48] sm:$0xff]
  %v537 = vld [vmem:[%s5 + $0x50] sm:$0xff]
  %v538 = vld [vmem:[%s5 + $0x58] sm:$0xff]
  %v539 = vld [vmem:[%s5 + $0x60] sm:$0xff]
  %v540 = vld [vmem:[%s5 + $0x68] sm:$0xff]
  %v541 = vld [vmem:[%s5 + $0x70] sm:$0xff]
  %v542 = vld [vmem:[%s5 + $0x78] sm:$0xff]
  %v543 = vld [vmem:[%s5 + $0x80] sm:$0xff]
  %v544 = vld [vmem:[%s5 + $0x88] sm:$0xff]
  %v545 = vld [vmem:[%s5 + $0x90] sm:$0xff]
  %v546 = vld [vmem:[%s5 + $0x98] sm:$0xff]
  %v547 = vld [vmem:[%s5 + $0xa0] sm:$0xff]
  %v548 = vld [vmem:[%s5 + $0xa8] sm:$0xff]
  %v549 = vld [vmem:[%s5 + $0xb0] sm:$0xff]
  %v550 = vld [vmem:[%s5 + $0xb8] sm:$0xff]
  %v551 = vld [vmem:[%s5 + $0xc0] sm:$0xff]
  %v552 = vld [vmem:[%s5 + $0xc8] sm:$0xff]
  %v553 = vld [vmem:[%s5 + $0xd0] sm:$0xff]
  %v554 = vld [vmem:[%s5 + $0xd8] sm:$0xff]
  %v555 = vld [vmem:[%s5 + $0xe0] sm:$0xff]
  %v556 = vld [vmem:[%s5 + $0xe8] sm:$0xff]
  %v557 = vld [vmem:[%s5 + $0xf0] sm:$0xff]
  %v558 = vld [vmem:[%s5 + $0xf8] sm:$0xff]
  %v559 = vld [vmem:[%s5 + $0x100] sm:$0xff]
  %v560 = vld [vmem:[%s5 + $0x108] sm:$0xff]
  %v561 = vld [vmem:[%s5 + $0x110] sm:$0xff]
  %v562 = vld [vmem:[%s5 + $0x118] sm:$0xff]
  %v563 = vld [vmem:[%s5 + $0x120] sm:$0xff]
  %v564 = vld [vmem:[%s5 + $0x128] sm:$0xff]
  %v565 = vld [vmem:[%s5 + $0x130] sm:$0xff]
  %v566 = vld [vmem:[%s5 + $0x138] sm:$0xff]
  %v567 = vld [vmem:[%s5 + $0x140] sm:$0xff]
  %v568 = vld [vmem:[%s5 + $0x148] sm:$0xff]
  %v569 = vld [vmem:[%s5 + $0x150] sm:$0xff]
  %v570 = vld [vmem:[%s5 + $0x158] sm:$0xff]
  %v571 = vld [vmem:[%s5 + $0x160] sm:$0xff]
  %v572 = vld [vmem:[%s5 + $0x168] sm:$0xff]
  %v573 = vld [vmem:[%s5 + $0x170] sm:$0xff]
  %v574 = vld [vmem:[%s5 + $0x178] sm:$0xff]
  %v575 = vld [vmem:[%s5 + $0x180] sm:$0xff]
  %v576 = vld [vmem:[%s5 + $0x188] sm:$0xff]
  %v577 = vld [vmem:[%s5 + $0x190] sm:$0xff]
  %v578 = vld [vmem:[%s5 + $0x198] sm:$0xff]
  %v579 = vld [vmem:[%s5 + $0x1a0] sm:$0xff]
  %v580 = vld [vmem:[%s5 + $0x1a8] sm:$0xff]
  %v581 = vld [vmem:[%s5 + $0x1b0] sm:$0xff]
  %v582 = vld [vmem:[%s5 + $0x1b8] sm:$0xff]
  %v583 = vld [vmem:[%s5 + $0x1c0] sm:$0xff]
  %v584 = vld [vmem:[%s5 + $0x1c8] sm:$0xff]
  %v585 = vld [vmem:[%s5 + $0x1d0] sm:$0xff]
  %v586 = vld [vmem:[%s5 + $0x1d8] sm:$0xff]
  %v587 = vld [vmem:[%s5 + $0x1e0] sm:$0xff]
  %v588 = vld [vmem:[%s5 + $0x1e8] sm:$0xff]
  %v589 = vld [vmem:[%s5 + $0x1f0] sm:$0xff]
  %v590 = vld [vmem:[%s5 + $0x1f8] sm:$0xff]
  %v591 = vld [vmem:[%s5 + $0x200] sm:$0xff]
  %v592 = vld [vmem:[%s5 + $0x208] sm:$0xff]
  %v593 = vld [vmem:[%s5 + $0x210] sm:$0xff]
  %v594 = vld [vmem:[%s5 + $0x218] sm:$0xff]
  %v595 = vld [vmem:[%s5 + $0x220] sm:$0xff]
  %v596 = vld [vmem:[%s5 + $0x228] sm:$0xff]
  %v597 = vld [vmem:[%s5 + $0x230] sm:$0xff]
  %v598 = vld [vmem:[%s5 + $0x238] sm:$0xff]
  %v599 = vld [vmem:[%s5 + $0x240] sm:$0xff]
  %v600 = vld [vmem:[%s5 + $0x248] sm:$0xff]
  %v601 = vld [vmem:[%s5 + $0x250] sm:$0xff]
  %v602 = vld [vmem:[%s5 + $0x258] sm:$0xff]
  %v603 = vld [vmem:[%s5 + $0x260] sm:$0xff]
  %v604 = vld [vmem:[%s5 + $0x268] sm:$0xff]
  %v605 = vld [vmem:[%s5 + $0x270] sm:$0xff]
  %v606 = vld [vmem:[%s5 + $0x278] sm:$0xff]
  %v607 = vld [vmem:[%s5 + $0x280] sm:$0xff]
  %v608 = vld [vmem:[%s5 + $0x288] sm:$0xff]
  %v609 = vld [vmem:[%s5 + $0x290] sm:$0xff]
  %v610 = vld [vmem:[%s5 + $0x298] sm:$0xff]
  %v611 = vld [vmem:[%s5 + $0x2a0] sm:$0xff]
  %v612 = vld [vmem:[%s5 + $0x2a8] sm:$0xff]
  %v613 = vld [vmem:[%s5 + $0x2b0] sm:$0xff]
  %v614 = vld [vmem:[%s5 + $0x2b8] sm:$0xff]
  %v615 = vld [vmem:[%s5 + $0x2c0] sm:$0xff]
  %v616 = vld [vmem:[%s5 + $0x2c8] sm:$0xff]
  %v617 = vld [vmem:[%s5 + $0x2d0] sm:$0xff]
  %v618 = vld [vmem:[%s5 + $0x2d8] sm:$0xff]
  %v619 = vld [vmem:[%s5 + $0x2e0] sm:$0xff]
  %v620 = vld [vmem:[%s5 + $0x2e8] sm:$0xff]
  %v621 = vld [vmem:[%s5 + $0x2f0] sm:$0xff]
  %v622 = vld [vmem:[%s5 + $0x2f8] sm:$0xff]
  %v623 = vld [vmem:[%s6] sm:$0x7]
  %v625 = vlaneseq
  %v626 = vshrl.u32 %v625, 7
  %v627 = vsub.s32 0, %v626
  %v628 = vrot.slane %v623, %v627
  %v629 = vlaneseq
  %v630 = vshrl.u32 %v629, 7
  %v631 = vsub.s32 1, %v630
  %v632 = vrot.slane %v623, %v631
  %v633 = vlaneseq
  %v634 = vshrl.u32 %v633, 7
  %v635 = vsub.s32 2, %v634
  %v636 = vrot.slane %v623, %v635
  %640 = vmatprep.subr.mxu0 %v528
  %641 = vmatpush1.msra.mxu0 %v527
  %642 = vmatprep.subr.mxu0 %v531
  %643 = vmatpush1.msra.mxu0 %v530
  %644 = vmatprep.subr.mxu0 %v534
  %645 = vmatpush1.msra.mxu0 %v533
  %646 = vmatprep.subr.mxu0 %v537
  %647 = vmatpush1.msra.mxu0 %v536
  %648 = vmatprep.subr.mxu0 %v540
  %649 = vmatpush1.msra.mxu0 %v539
  %650 = vmatprep.subr.mxu0 %v543
  %651 = vmatpush1.msra.mxu0 %v542
  %652 = vmatprep.subr.mxu0 %v546
  %653 = vmatpush1.msra.mxu0 %v545
  %654 = vmatprep.subr.mxu0 %v549
  %655 = vmatpush1.msra.mxu0 %v548
  %656 = vmatprep.subr.mxu0 %v552
  %657 = vmatpush1.msra.mxu0 %v551
  %658 = vmatprep.subr.mxu0 %v555
  %659 = vmatpush1.msra.mxu0 %v554
  %660 = vmatprep.subr.mxu0 %v558
  %661 = vmatpush1.msra.mxu0 %v557
  %662 = vmatprep.subr.mxu0 %v561
  %663 = vmatpush1.msra.mxu0 %v560
  %664 = vmatprep.subr.mxu0 %v564
  %665 = vmatpush1.msra.mxu0 %v563
  %666 = vmatprep.subr.mxu0 %v567
  %667 = vmatpush1.msra.mxu0 %v566
  %668 = vmatprep.subr.mxu0 %v570
  %669 = vmatpush1.msra.mxu0 %v569
  %670 = vmatprep.subr.mxu0 %v573
  %671 = vmatpush1.msra.mxu0 %v572
  %672 = vmatprep.subr.mxu0 %v576
  %673 = vmatpush1.msra.mxu0 %v575
  %674 = vmatprep.subr.mxu0 %v579
  %675 = vmatpush1.msra.mxu0 %v578
  %676 = vmatprep.subr.mxu0 %v582
  %677 = vmatpush1.msra.mxu0 %v581
  %678 = vmatprep.subr.mxu0 %v585
  %679 = vmatpush1.msra.mxu0 %v584
  %680 = vmatprep.subr.mxu0 %v588
  %681 = vmatpush1.msra.mxu0 %v587
  %682 = vmatprep.subr.mxu0 %v591
  %683 = vmatpush1.msra.mxu0 %v590
  %684 = vmatprep.subr.mxu0 %v594
  %685 = vmatpush1.msra.mxu0 %v593
  %686 = vmatprep.subr.mxu0 %v597
  %687 = vmatpush1.msra.mxu0 %v596
  %688 = vmatprep.subr.mxu0 %v600
  %689 = vmatpush1.msra.mxu0 %v599
  %690 = vmatprep.subr.mxu0 %v603
  %691 = vmatpush1.msra.mxu0 %v602
  %692 = vmatprep.subr.mxu0 %v606
  %693 = vmatpush1.msra.mxu0 %v605
  %694 = vmatprep.subr.mxu0 %v609
  %695 = vmatpush1.msra.mxu0 %v608
  %696 = vmatprep.subr.mxu0 %v612
  %697 = vmatpush1.msra.mxu0 %v611
  %698 = vmatprep.subr.mxu0 %v615
  %699 = vmatpush1.msra.mxu0 %v614
  %700 = vmatprep.subr.mxu0 %v618
  %701 = vmatpush1.msra.mxu0 %v617
  %702 = vmatprep.subr.mxu0 %v621
  %703 = vmatpush1.msra.mxu0 %v620
  %704 = vmatprep.mubr.f32.mxu0 %v526
  %705 = vmatmul.mubr.f32.gmra.mrb[0].mxu0 %v525
  %v706 = vpop.f32.mrb[0].mxu0
  %v707 = vadd.f32 %v628, %v706
  %v708 = vpop.f32.mrb[0].mxu0
  %v709 = vadd.f32 %v632, %v708
  %710 = vdwg.mxu0
  %711 = vmatprep.subr.mxu0 0.0
  %712 = vmatpush1.msra.mxu0 %v529
  %713 = vmatprep.subr.mxu0 0.0
  %714 = vmatpush1.msra.mxu0 %v532
  %715 = vmatprep.subr.mxu0 0.0
  %716 = vmatpush1.msra.mxu0 %v535
  %717 = vmatprep.subr.mxu0 0.0
  %718 = vmatpush1.msra.mxu0 %v538
  %719 = vmatprep.subr.mxu0 0.0
  %720 = vmatpush1.msra.mxu0 %v541
  %721 = vmatprep.subr.mxu0 0.0
  %722 = vmatpush1.msra.mxu0 %v544
  %723 = vmatprep.subr.mxu0 0.0
  %724 = vmatpush1.msra.mxu0 %v547
  %725 = vmatprep.subr.mxu0 0.0
  %726 = vmatpush1.msra.mxu0 %v550
  %727 = vmatprep.subr.mxu0 0.0
  %728 = vmatpush1.msra.mxu0 %v553
  %729 = vmatprep.subr.mxu0 0.0
  %730 = vmatpush1.msra.mxu0 %v556
  %731 = vmatprep.subr.mxu0 0.0
  %732 = vmatpush1.msra.mxu0 %v559
  %733 = vmatprep.subr.mxu0 0.0
  %734 = vmatpush1.msra.mxu0 %v562
  %735 = vmatprep.subr.mxu0 0.0
  %736 = vmatpush1.msra.mxu0 %v565
  %737 = vmatprep.subr.mxu0 0.0
  %738 = vmatpush1.msra.mxu0 %v568
  %739 = vmatprep.subr.mxu0 0.0
  %740 = vmatpush1.msra.mxu0 %v571
  %741 = vmatprep.subr.mxu0 0.0
  %742 = vmatpush1.msra.mxu0 %v574
  %743 = vmatprep.subr.mxu0 0.0
  %744 = vmatpush1.msra.mxu0 %v577
  %745 = vmatprep.subr.mxu0 0.0
  %746 = vmatpush1.msra.mxu0 %v580
  %747 = vmatprep.subr.mxu0 0.0
  %748 = vmatpush1.msra.mxu0 %v583
  %749 = vmatprep.subr.mxu0 0.0
  %750 = vmatpush1.msra.mxu0 %v586
  %751 = vmatprep.subr.mxu0 0.0
  %752 = vmatpush1.msra.mxu0 %v589
  %753 = vmatprep.subr.mxu0 0.0
  %754 = vmatpush1.msra.mxu0 %v592
  %755 = vmatprep.subr.mxu0 0.0
  %756 = vmatpush1.msra.mxu0 %v595
  %757 = vmatprep.subr.mxu0 0.0
  %758 = vmatpush1.msra.mxu0 %v598
  %759 = vmatprep.subr.mxu0 0.0
  %760 = vmatpush1.msra.mxu0 %v601
  %761 = vmatprep.subr.mxu0 0.0
  %762 = vmatpush1.msra.mxu0 %v604
  %763 = vmatprep.subr.mxu0 0.0
  %764 = vmatpush1.msra.mxu0 %v607
  %765 = vmatprep.subr.mxu0 0.0
  %766 = vmatpush1.msra.mxu0 %v610
  %767 = vmatprep.subr.mxu0 0.0
  %768 = vmatpush1.msra.mxu0 %v613
  %769 = vmatprep.subr.mxu0 0.0
  %770 = vmatpush1.msra.mxu0 %v616
  %771 = vmatprep.subr.mxu0 0.0
  %772 = vmatpush1.msra.mxu0 %v619
  %773 = vmatprep.subr.mxu0 0.0
  %774 = vmatpush1.msra.mxu0 %v622
  %775 = vmatprep.mubr.f32.mxu0 %v526
  %776 = vmatmul.mubr.f32.gmra.mrb[0].mxu0 %v525
  %v777 = vpop.f32.mrb[0].mxu0
  %v778 = vadd.f32 %v636, %v777
  %v779 = vpop.f32.mrb[0].mxu0
  %780 = vdwg.mxu0
  %v781 = vld [vmem:[%s7] sm:$0xff]
  %v782 = vld [vmem:[%s7 + $0x8] sm:$0xff]
  %v783 = vld [vmem:[%s7 + $0x10] sm:$0xff]
  %v784 = vld [vmem:[%s7 + $0x18] sm:$0xff]
  %v785 = vld [vmem:[%s7 + $0x20] sm:$0xff]
  %v786 = vld [vmem:[%s7 + $0x28] sm:$0xff]
  %v787 = vld [vmem:[%s7 + $0x30] sm:$0xff]
  %v788 = vld [vmem:[%s7 + $0x38] sm:$0xff]
  %v789 = vld [vmem:[%s7 + $0x40] sm:$0xff]
  %v790 = vld [vmem:[%s7 + $0x48] sm:$0xff]
  %v791 = vld [vmem:[%s7 + $0x50] sm:$0xff]
  %v792 = vld [vmem:[%s7 + $0x58] sm:$0xff]
  %v793 = vld [vmem:[%s7 + $0x60] sm:$0xff]
  %v794 = vld [vmem:[%s7 + $0x68] sm:$0xff]
  %v795 = vld [vmem:[%s7 + $0x70] sm:$0xff]
  %v796 = vld [vmem:[%s7 + $0x78] sm:$0xff]
  %v797 = vld [vmem:[%s7 + $0x80] sm:$0xff]
  %v798 = vld [vmem:[%s7 + $0x88] sm:$0xff]
  %v799 = vld [vmem:[%s7 + $0x90] sm:$0xff]
  %v800 = vld [vmem:[%s7 + $0x98] sm:$0xff]
  %v801 = vld [vmem:[%s7 + $0xa0] sm:$0xff]
  %v802 = vld [vmem:[%s7 + $0xa8] sm:$0xff]
  %v803 = vld [vmem:[%s7 + $0xb0] sm:$0xff]
  %v804 = vld [vmem:[%s7 + $0xb8] sm:$0xff]
  %v805 = vld [vmem:[%s7 + $0xc0] sm:$0xff]
  %v806 = vld [vmem:[%s7 + $0xc8] sm:$0xff]
  %v807 = vld [vmem:[%s7 + $0xd0] sm:$0xff]
  %v808 = vld [vmem:[%s7 + $0xd8] sm:$0xff]
  %v809 = vld [vmem:[%s7 + $0xe0] sm:$0xff]
  %v810 = vld [vmem:[%s7 + $0xe8] sm:$0xff]
  %v811 = vld [vmem:[%s7 + $0xf0] sm:$0xff]
  %v812 = vld [vmem:[%s7 + $0xf8] sm:$0xff]
  %v813 = vld [vmem:[%s7 + $0x100] sm:$0xff]
  %v814 = vld [vmem:[%s7 + $0x108] sm:$0xff]
  %v815 = vld [vmem:[%s7 + $0x110] sm:$0xff]
  %v816 = vld [vmem:[%s7 + $0x118] sm:$0xff]
  %v817 = vld [vmem:[%s7 + $0x120] sm:$0xff]
  %v818 = vld [vmem:[%s7 + $0x128] sm:$0xff]
  %v819 = vld [vmem:[%s7 + $0x130] sm:$0xff]
  %v820 = vld [vmem:[%s7 + $0x138] sm:$0xff]
  %v821 = vld [vmem:[%s7 + $0x140] sm:$0xff]
  %v822 = vld [vmem:[%s7 + $0x148] sm:$0xff]
  %v823 = vld [vmem:[%s7 + $0x150] sm:$0xff]
  %v824 = vld [vmem:[%s7 + $0x158] sm:$0xff]
  %v825 = vld [vmem:[%s7 + $0x160] sm:$0xff]
  %v826 = vld [vmem:[%s7 + $0x168] sm:$0xff]
  %v827 = vld [vmem:[%s7 + $0x170] sm:$0xff]
  %v828 = vld [vmem:[%s7 + $0x178] sm:$0xff]
  %v829 = vld [vmem:[%s8] sm:$0x7]
  %v831 = vlaneseq
  %v832 = vshrl.u32 %v831, 7
  %v833 = vsub.s32 0, %v832
  %v834 = vrot.slane %v829, %v833
  %v835 = vlaneseq
  %v836 = vshrl.u32 %v835, 7
  %v837 = vsub.s32 1, %v836
  %v838 = vrot.slane %v829, %v837
  %v841 = vadd.f32 %v707, %v834
  %v842 = vadd.f32 %v709, %v838
  %843 = vmatprep.subr.mxu0 %v782
  %844 = vmatpush1.msra.mxu0 %v781
  %845 = vmatprep.subr.mxu0 %v785
  %846 = vmatpush1.msra.mxu0 %v784
  %847 = vmatprep.subr.mxu0 %v788
  %848 = vmatpush1.msra.mxu0 %v787
  %849 = vmatprep.subr.mxu0 %v791
  %850 = vmatpush1.msra.mxu0 %v790
  %851 = vmatprep.subr.mxu0 %v794
  %852 = vmatpush1.msra.mxu0 %v793
  %853 = vmatprep.subr.mxu0 %v797
  %854 = vmatpush1.msra.mxu0 %v796
  %855 = vmatprep.subr.mxu0 %v800
  %856 = vmatpush1.msra.mxu0 %v799
  %857 = vmatprep.subr.mxu0 %v803
  %858 = vmatpush1.msra.mxu0 %v802
  %859 = vmatprep.subr.mxu0 %v806
  %860 = vmatpush1.msra.mxu0 %v805
  %861 = vmatprep.subr.mxu0 %v809
  %862 = vmatpush1.msra.mxu0 %v808
  %863 = vmatprep.subr.mxu0 %v812
  %864 = vmatpush1.msra.mxu0 %v811
  %865 = vmatprep.subr.mxu0 %v815
  %866 = vmatpush1.msra.mxu0 %v814
  %867 = vmatprep.subr.mxu0 %v818
  %868 = vmatpush1.msra.mxu0 %v817
  %869 = vmatprep.subr.mxu0 %v821
  %870 = vmatpush1.msra.mxu0 %v820
  %871 = vmatprep.subr.mxu0 %v824
  %872 = vmatpush1.msra.mxu0 %v823
  %873 = vmatprep.subr.mxu0 %v827
  %874 = vmatpush1.msra.mxu0 %v826
  %875 = vmatprep.subr.mxu0 0.0
  %876 = vmatpush1.msra.mxu0 0.0
  %877 = vmatprep.subr.mxu0 0.0
  %878 = vmatpush1.msra.mxu0 0.0
  %879 = vmatprep.subr.mxu0 0.0
  %880 = vmatpush1.msra.mxu0 0.0
  %881 = vmatprep.subr.mxu0 0.0
  %882 = vmatpush1.msra.mxu0 0.0
  %883 = vmatprep.subr.mxu0 0.0
  %884 = vmatpush1.msra.mxu0 0.0
  %885 = vmatprep.subr.mxu0 0.0
  %886 = vmatpush1.msra.mxu0 0.0
  %887 = vmatprep.subr.mxu0 0.0
  %888 = vmatpush1.msra.mxu0 0.0
  %889 = vmatprep.subr.mxu0 0.0
  %890 = vmatpush1.msra.mxu0 0.0
  %891 = vmatprep.subr.mxu0 0.0
  %892 = vmatpush1.msra.mxu0 0.0
  %893 = vmatprep.subr.mxu0 0.0
  %894 = vmatpush1.msra.mxu0 0.0
  %895 = vmatprep.subr.mxu0 0.0
  %896 = vmatpush1.msra.mxu0 0.0
  %897 = vmatprep.subr.mxu0 0.0
  %898 = vmatpush1.msra.mxu0 0.0
  %899 = vmatprep.subr.mxu0 0.0
  %900 = vmatpush1.msra.mxu0 0.0
  %901 = vmatprep.subr.mxu0 0.0
  %902 = vmatpush1.msra.mxu0 0.0
  %903 = vmatprep.subr.mxu0 0.0
  %904 = vmatpush1.msra.mxu0 0.0
  %905 = vmatprep.subr.mxu0 0.0
  %906 = vmatpush1.msra.mxu0 0.0
  %907 = vmatprep.mubr.f32.mxu0 0.0
  %908 = vmatmul.mubr.f32.gmra.mrb[0].mxu0 0.0
  %v909 = vpop.f32.mrb[0].mxu0
  %v910 = vadd.f32 0.0, %v909
  %v911 = vpop.f32.mrb[0].mxu0
  %v912 = vadd.f32 0.0, %v911
  %913 = vdwg.mxu0
  %914 = vmatprep.subr.mxu0 0.0
  %915 = vmatpush1.msra.mxu0 %v783
  %916 = vmatprep.subr.mxu0 0.0
  %917 = vmatpush1.msra.mxu0 %v786
  %918 = vmatprep.subr.mxu0 0.0
  %919 = vmatpush1.msra.mxu0 %v789
  %920 = vmatprep.subr.mxu0 0.0
  %921 = vmatpush1.msra.mxu0 %v792
  %922 = vmatprep.subr.mxu0 0.0
  %923 = vmatpush1.msra.mxu0 %v795
  %924 = vmatprep.subr.mxu0 0.0
  %925 = vmatpush1.msra.mxu0 %v798
  %926 = vmatprep.subr.mxu0 0.0
  %927 = vmatpush1.msra.mxu0 %v801
  %928 = vmatprep.subr.mxu0 0.0
  %929 = vmatpush1.msra.mxu0 %v804
  %930 = vmatprep.subr.mxu0 0.0
  %931 = vmatpush1.msra.mxu0 %v807
  %932 = vmatprep.subr.mxu0 0.0
  %933 = vmatpush1.msra.mxu0 %v810
  %934 = vmatprep.subr.mxu0 0.0
  %935 = vmatpush1.msra.mxu0 %v813
  %936 = vmatprep.subr.mxu0 0.0
  %937 = vmatpush1.msra.mxu0 %v816
  %938 = vmatprep.subr.mxu0 0.0
  %939 = vmatpush1.msra.mxu0 %v819
  %940 = vmatprep.subr.mxu0 0.0
  %941 = vmatpush1.msra.mxu0 %v822
  %942 = vmatprep.subr.mxu0 0.0
  %943 = vmatpush1.msra.mxu0 %v825
  %944 = vmatprep.subr.mxu0 0.0
  %945 = vmatpush1.msra.mxu0 %v828
  %946 = vmatprep.subr.mxu0 0.0
  %947 = vmatpush1.msra.mxu0 0.0
  %948 = vmatprep.subr.mxu0 0.0
  %949 = vmatpush1.msra.mxu0 0.0
  %950 = vmatprep.subr.mxu0 0.0
  %951 = vmatpush1.msra.mxu0 0.0
  %952 = vmatprep.subr.mxu0 0.0
  %953 = vmatpush1.msra.mxu0 0.0
  %954 = vmatprep.subr.mxu0 0.0
  %955 = vmatpush1.msra.mxu0 0.0
  %956 = vmatprep.subr.mxu0 0.0
  %957 = vmatpush1.msra.mxu0 0.0
  %958 = vmatprep.subr.mxu0 0.0
  %959 = vmatpush1.msra.mxu0 0.0
  %960 = vmatprep.subr.mxu0 0.0
  %961 = vmatpush1.msra.mxu0 0.0
  %962 = vmatprep.subr.mxu0 0.0
  %963 = vmatpush1.msra.mxu0 0.0
  %964 = vmatprep.subr.mxu0 0.0
  %965 = vmatpush1.msra.mxu0 0.0
  %966 = vmatprep.subr.mxu0 0.0
  %967 = vmatpush1.msra.mxu0 0.0
  %968 = vmatprep.subr.mxu0 0.0
  %969 = vmatpush1.msra.mxu0 0.0
  %970 = vmatprep.subr.mxu0 0.0
  %971 = vmatpush1.msra.mxu0 0.0
  %972 = vmatprep.subr.mxu0 0.0
  %973 = vmatpush1.msra.mxu0 0.0
  %974 = vmatprep.subr.mxu0 0.0
  %975 = vmatpush1.msra.mxu0 0.0
  %976 = vmatprep.subr.mxu0 0.0
  %977 = vmatpush1.msra.mxu0 0.0
  %978 = vmatprep.mubr.f32.mxu0 0.0
  %979 = vmatmul.mubr.f32.gmra.mrb[0].mxu0 0.0
  %v980 = vpop.f32.mrb[0].mxu0
  %v981 = vadd.f32 0.0, %v980
  %v982 = vpop.f32.mrb[0].mxu0
  %983 = vdwg.mxu0
  %v984 = vadd.f32 %v841, %v910
  %v985 = vadd.f32 %v842, %v912
  %v986 = vxor.u32 %v984, 2147483648
  %v987 = vxor.u32 %v985, 2147483648
  %v988 = vmul.f32 %v986, 1.442695
  %v989 = vpow.pop %v988
  %v990 = vmul.f32 %v987, 1.442695
  %v991 = vpow.pop %v990
  %v992 = vadd.f32 %v989, 1.0
  %v993 = vadd.f32 %v991, 1.0
  %v994 = vrcp.pop %v992
  %v995 = vmul.f32 1.0, %v994
  %v996 = vrcp.pop %v993
  %v997 = vmul.f32 1.0, %v996
  %v998 = vlaneseq
  %v999 = vshrl.u32 %v998, 7
  %v1000 = vsub.s32 2, %v999
  %v1001 = vrot.slane %v829, %v1000
  %v1003 = vadd.f32 %v981, %v1001
  %v1004 = vmul.f32 %v995, %v1003
  %v1005 = vadd.f32 %v778, %v1004
  %v1006 = vtanh.pop %v1005
  %v1007 = vsub.f32 1.0, %v997
  %v1008 = vmul.f32 %v1007, %v1006
  %v1009 = vmul.f32 %v997, 0.0
  %v1010 = vadd.f32 %v1008, %v1009
  %1011 = vmatprep.subr.mxu0 %v782
  %1012 = vmatpush1.msra.mxu0 %v781
  %1013 = vmatprep.subr.mxu0 %v785
  %1014 = vmatpush1.msra.mxu0 %v784
  %1015 = vmatprep.subr.mxu0 %v788
  %1016 = vmatpush1.msra.mxu0 %v787
  %1017 = vmatprep.subr.mxu0 %v791
  %1018 = vmatpush1.msra.mxu0 %v790
  %1019 = vmatprep.subr.mxu0 %v794
  %1020 = vmatpush1.msra.mxu0 %v793
  %1021 = vmatprep.subr.mxu0 %v797
  %1022 = vmatpush1.msra.mxu0 %v796
  %1023 = vmatprep.subr.mxu0 %v800
  %1024 = vmatpush1.msra.mxu0 %v799
  %1025 = vmatprep.subr.mxu0 %v803
  %1026 = vmatpush1.msra.mxu0 %v802
  %1027 = vmatprep.subr.mxu0 %v806
  %1028 = vmatpush1.msra.mxu0 %v805
  %1029 = vmatprep.subr.mxu0 %v809
  %1030 = vmatpush1.msra.mxu0 %v808
  %1031 = vmatprep.subr.mxu0 %v812
  %1032 = vmatpush1.msra.mxu0 %v811
  %1033 = vmatprep.subr.mxu0 %v815
  %1034 = vmatpush1.msra.mxu0 %v814
  %1035 = vmatprep.subr.mxu0 %v818
  %1036 = vmatpush1.msra.mxu0 %v817
  %1037 = vmatprep.subr.mxu0 %v821
  %1038 = vmatpush1.msra.mxu0 %v820
  %1039 = vmatprep.subr.mxu0 %v824
  %1040 = vmatpush1.msra.mxu0 %v823
  %1041 = vmatprep.subr.mxu0 %v827
  %1042 = vmatpush1.msra.mxu0 %v826
  %1043 = vmatprep.subr.mxu0 0.0
  %1044 = vmatpush1.msra.mxu0 0.0
  %1045 = vmatprep.subr.mxu0 0.0
  %1046 = vmatpush1.msra.mxu0 0.0
  %1047 = vmatprep.subr.mxu0 0.0
  %1048 = vmatpush1.msra.mxu0 0.0
  %1049 = vmatprep.subr.mxu0 0.0
  %1050 = vmatpush1.msra.mxu0 0.0
  %1051 = vmatprep.subr.mxu0 0.0
  %1052 = vmatpush1.msra.mxu0 0.0
  %1053 = vmatprep.subr.mxu0 0.0
  %1054 = vmatpush1.msra.mxu0 0.0
  %1055 = vmatprep.subr.mxu0 0.0
  %1056 = vmatpush1.msra.mxu0 0.0
  %1057 = vmatprep.subr.mxu0 0.0
  %1058 = vmatpush1.msra.mxu0 0.0
  %1059 = vmatprep.subr.mxu0 0.0
  %1060 = vmatpush1.msra.mxu0 0.0
  %1061 = vmatprep.subr.mxu0 0.0
  %1062 = vmatpush1.msra.mxu0 0.0
  %1063 = vmatprep.subr.mxu0 0.0
  %1064 = vmatpush1.msra.mxu0 0.0
  %1065 = vmatprep.subr.mxu0 0.0
  %1066 = vmatpush1.msra.mxu0 0.0
  %1067 = vmatprep.subr.mxu0 0.0
  %1068 = vmatpush1.msra.mxu0 0.0
  %1069 = vmatprep.subr.mxu0 0.0
  %1070 = vmatpush1.msra.mxu0 0.0
  %1071 = vmatprep.subr.mxu0 0.0
  %1072 = vmatpush1.msra.mxu0 0.0
  %1073 = vmatprep.subr.mxu0 0.0
  %1074 = vmatpush1.msra.mxu0 0.0
  %1075 = vmatprep.mubr.f32.mxu0 0.0
  %1076 = vmatmul.mubr.f32.gmra.mrb[0].mxu0 %v1010
  %v1077 = vpop.f32.mrb[0].mxu0
  %v1078 = vadd.f32 0.0, %v1077
  %v1079 = vpop.f32.mrb[0].mxu0
  %v1080 = vadd.f32 0.0, %v1079
  %1081 = vdwg.mxu0
  %1082 = vmatprep.subr.mxu0 0.0
  %1083 = vmatpush1.msra.mxu0 %v783
  %1084 = vmatprep.subr.mxu0 0.0
  %1085 = vmatpush1.msra.mxu0 %v786
  %1086 = vmatprep.subr.mxu0 0.0
  %1087 = vmatpush1.msra.mxu0 %v789
  %1088 = vmatprep.subr.mxu0 0.0
  %1089 = vmatpush1.msra.mxu0 %v792
  %1090 = vmatprep.subr.mxu0 0.0
  %1091 = vmatpush1.msra.mxu0 %v795
  %1092 = vmatprep.subr.mxu0 0.0
  %1093 = vmatpush1.msra.mxu0 %v798
  %1094 = vmatprep.subr.mxu0 0.0
  %1095 = vmatpush1.msra.mxu0 %v801
  %1096 = vmatprep.subr.mxu0 0.0
  %1097 = vmatpush1.msra.mxu0 %v804
  %1098 = vmatprep.subr.mxu0 0.0
  %1099 = vmatpush1.msra.mxu0 %v807
  %1100 = vmatprep.subr.mxu0 0.0
  %1101 = vmatpush1.msra.mxu0 %v810
  %1102 = vmatprep.subr.mxu0 0.0
  %1103 = vmatpush1.msra.mxu0 %v813
  %1104 = vmatprep.subr.mxu0 0.0
  %1105 = vmatpush1.msra.mxu0 %v816
  %1106 = vmatprep.subr.mxu0 0.0
  %1107 = vmatpush1.msra.mxu0 %v819
  %1108 = vmatprep.subr.mxu0 0.0
  %1109 = vmatpush1.msra.mxu0 %v822
  %1110 = vmatprep.subr.mxu0 0.0
  %1111 = vmatpush1.msra.mxu0 %v825
  %1112 = vmatprep.subr.mxu0 0.0
  %1113 = vmatpush1.msra.mxu0 %v828
  %1114 = vmatprep.subr.mxu0 0.0
  %1115 = vmatpush1.msra.mxu0 0.0
  %1116 = vmatprep.subr.mxu0 0.0
  %1117 = vmatpush1.msra.mxu0 0.0
  %1118 = vmatprep.subr.mxu0 0.0
  %1119 = vmatpush1.msra.mxu0 0.0
  %1120 = vmatprep.subr.mxu0 0.0
  %1121 = vmatpush1.msra.mxu0 0.0
  %1122 = vmatprep.subr.mxu0 0.0
  %1123 = vmatpush1.msra.mxu0 0.0
  %1124 = vmatprep.subr.mxu0 0.0
  %1125 = vmatpush1.msra.mxu0 0.0
  %1126 = vmatprep.subr.mxu0 0.0
  %1127 = vmatpush1.msra.mxu0 0.0
  %1128 = vmatprep.subr.mxu0 0.0
  %1129 = vmatpush1.msra.mxu0 0.0
  %1130 = vmatprep.subr.mxu0 0.0
  %1131 = vmatpush1.msra.mxu0 0.0
  %1132 = vmatprep.subr.mxu0 0.0
  %1133 = vmatpush1.msra.mxu0 0.0
  %1134 = vmatprep.subr.mxu0 0.0
  %1135 = vmatpush1.msra.mxu0 0.0
  %1136 = vmatprep.subr.mxu0 0.0
  %1137 = vmatpush1.msra.mxu0 0.0
  %1138 = vmatprep.subr.mxu0 0.0
  %1139 = vmatpush1.msra.mxu0 0.0
  %1140 = vmatprep.subr.mxu0 0.0
  %1141 = vmatpush1.msra.mxu0 0.0
  %1142 = vmatprep.subr.mxu0 0.0
  %1143 = vmatpush1.msra.mxu0 0.0
  %1144 = vmatprep.subr.mxu0 0.0
  %1145 = vmatpush1.msra.mxu0 0.0
  %1146 = vmatprep.mubr.f32.mxu0 0.0
  %1147 = vmatmul.mubr.f32.gmra.mrb[0].mxu0 %v1010
  %v1148 = vpop.f32.mrb[0].mxu0
  %v1149 = vadd.f32 0.0, %v1148
  %v1150 = vpop.f32.mrb[0].mxu0
  %1151 = vdwg.mxu0
  %v1154 = vrot.slane %v1078, 7
  %v1155 = vrot.slane %v1080, 7
  %v1158 = vadd.f32 %v841, %v1154
  %v1159 = vadd.f32 %v842, %v1155
  %v1160 = vxor.u32 %v1158, 2147483648
  %v1161 = vxor.u32 %v1159, 2147483648
  %v1162 = vmul.f32 %v1160, 1.442695
  %v1163 = vpow.pop %v1162
  %v1164 = vmul.f32 %v1161, 1.442695
  %v1165 = vpow.pop %v1164
  %v1166 = vadd.f32 %v1163, 1.0
  %v1167 = vadd.f32 %v1165, 1.0
  %v1168 = vrcp.pop %v1166
  %v1169 = vmul.f32 1.0, %v1168
  %v1170 = vrcp.pop %v1167
  %v1171 = vmul.f32 1.0, %v1170
  %v1172 = vadd.f32 %v1149, %v1001
  %v1174 = vrot.slane %v1172, 7
  %v1176 = vmul.f32 %v1169, %v1174
  %v1177 = vadd.f32 %v778, %v1176
  %v1178 = vtanh.pop %v1177
  %v1179 = vsub.f32 1.0, %v1171
  %v1180 = vmul.f32 %v1179, %v1178
  %v1182 = vrot.slane %v1010, 7
  %v1184 = vmul.f32 %v1171, %v1182
  %v1185 = vadd.f32 %v1180, %v1184
  %v1187 = vrot.slane %v1185, 1
  %1189 = vmatprep.subr.mxu0 %v782
  %1190 = vmatpush1.msra.mxu0 %v781
  %1191 = vmatprep.subr.mxu0 %v785
  %1192 = vmatpush1.msra.mxu0 %v784
  %1193 = vmatprep.subr.mxu0 %v788
  %1194 = vmatpush1.msra.mxu0 %v787
  %1195 = vmatprep.subr.mxu0 %v791
  %1196 = vmatpush1.msra.mxu0 %v790
  %1197 = vmatprep.subr.mxu0 %v794
  %1198 = vmatpush1.msra.mxu0 %v793
  %1199 = vmatprep.subr.mxu0 %v797
  %1200 = vmatpush1.msra.mxu0 %v796
  %1201 = vmatprep.subr.mxu0 %v800
  %1202 = vmatpush1.msra.mxu0 %v799
  %1203 = vmatprep.subr.mxu0 %v803
  %1204 = vmatpush1.msra.mxu0 %v802
  %1205 = vmatprep.subr.mxu0 %v806
  %1206 = vmatpush1.msra.mxu0 %v805
  %1207 = vmatprep.subr.mxu0 %v809
  %1208 = vmatpush1.msra.mxu0 %v808
  %1209 = vmatprep.subr.mxu0 %v812
  %1210 = vmatpush1.msra.mxu0 %v811
  %1211 = vmatprep.subr.mxu0 %v815
  %1212 = vmatpush1.msra.mxu0 %v814
  %1213 = vmatprep.subr.mxu0 %v818
  %1214 = vmatpush1.msra.mxu0 %v817
  %1215 = vmatprep.subr.mxu0 %v821
  %1216 = vmatpush1.msra.mxu0 %v820
  %1217 = vmatprep.subr.mxu0 %v824
  %1218 = vmatpush1.msra.mxu0 %v823
  %1219 = vmatprep.subr.mxu0 %v827
  %1220 = vmatpush1.msra.mxu0 %v826
  %1221 = vmatprep.subr.mxu0 0.0
  %1222 = vmatpush1.msra.mxu0 0.0
  %1223 = vmatprep.subr.mxu0 0.0
  %1224 = vmatpush1.msra.mxu0 0.0
  %1225 = vmatprep.subr.mxu0 0.0
  %1226 = vmatpush1.msra.mxu0 0.0
  %1227 = vmatprep.subr.mxu0 0.0
  %1228 = vmatpush1.msra.mxu0 0.0
  %1229 = vmatprep.subr.mxu0 0.0
  %1230 = vmatpush1.msra.mxu0 0.0
  %1231 = vmatprep.subr.mxu0 0.0
  %1232 = vmatpush1.msra.mxu0 0.0
  %1233 = vmatprep.subr.mxu0 0.0
  %1234 = vmatpush1.msra.mxu0 0.0
  %1235 = vmatprep.subr.mxu0 0.0
  %1236 = vmatpush1.msra.mxu0 0.0
  %1237 = vmatprep.subr.mxu0 0.0
  %1238 = vmatpush1.msra.mxu0 0.0
  %1239 = vmatprep.subr.mxu0 0.0
  %1240 = vmatpush1.msra.mxu0 0.0
  %1241 = vmatprep.subr.mxu0 0.0
  %1242 = vmatpush1.msra.mxu0 0.0
  %1243 = vmatprep.subr.mxu0 0.0
  %1244 = vmatpush1.msra.mxu0 0.0
  %1245 = vmatprep.subr.mxu0 0.0
  %1246 = vmatpush1.msra.mxu0 0.0
  %1247 = vmatprep.subr.mxu0 0.0
  %1248 = vmatpush1.msra.mxu0 0.0
  %1249 = vmatprep.subr.mxu0 0.0
  %1250 = vmatpush1.msra.mxu0 0.0
  %1251 = vmatprep.subr.mxu0 0.0
  %1252 = vmatpush1.msra.mxu0 0.0
  %1253 = vmatprep.mubr.f32.mxu0 0.0
  %1254 = vmatmul.mubr.f32.gmra.mrb[0].mxu0 %v1187
  %v1255 = vpop.f32.mrb[0].mxu0
  %v1256 = vadd.f32 0.0, %v1255
  %v1257 = vpop.f32.mrb[0].mxu0
  %v1258 = vadd.f32 0.0, %v1257
  %1259 = vdwg.mxu0
  %1260 = vmatprep.subr.mxu0 0.0
  %1261 = vmatpush1.msra.mxu0 %v783
  %1262 = vmatprep.subr.mxu0 0.0
  %1263 = vmatpush1.msra.mxu0 %v786
  %1264 = vmatprep.subr.mxu0 0.0
  %1265 = vmatpush1.msra.mxu0 %v789
  %1266 = vmatprep.subr.mxu0 0.0
  %1267 = vmatpush1.msra.mxu0 %v792
  %1268 = vmatprep.subr.mxu0 0.0
  %1269 = vmatpush1.msra.mxu0 %v795
  %1270 = vmatprep.subr.mxu0 0.0
  %1271 = vmatpush1.msra.mxu0 %v798
  %1272 = vmatprep.subr.mxu0 0.0
  %1273 = vmatpush1.msra.mxu0 %v801
  %1274 = vmatprep.subr.mxu0 0.0
  %1275 = vmatpush1.msra.mxu0 %v804
  %1276 = vmatprep.subr.mxu0 0.0
  %1277 = vmatpush1.msra.mxu0 %v807
  %1278 = vmatprep.subr.mxu0 0.0
  %1279 = vmatpush1.msra.mxu0 %v810
  %1280 = vmatprep.subr.mxu0 0.0
  %1281 = vmatpush1.msra.mxu0 %v813
  %1282 = vmatprep.subr.mxu0 0.0
  %1283 = vmatpush1.msra.mxu0 %v816
  %1284 = vmatprep.subr.mxu0 0.0
  %1285 = vmatpush1.msra.mxu0 %v819
  %1286 = vmatprep.subr.mxu0 0.0
  %1287 = vmatpush1.msra.mxu0 %v822
  %1288 = vmatprep.subr.mxu0 0.0
  %1289 = vmatpush1.msra.mxu0 %v825
  %1290 = vmatprep.subr.mxu0 0.0
  %1291 = vmatpush1.msra.mxu0 %v828
  %1292 = vmatprep.subr.mxu0 0.0
  %1293 = vmatpush1.msra.mxu0 0.0
  %1294 = vmatprep.subr.mxu0 0.0
  %1295 = vmatpush1.msra.mxu0 0.0
  %1296 = vmatprep.subr.mxu0 0.0
  %1297 = vmatpush1.msra.mxu0 0.0
  %1298 = vmatprep.subr.mxu0 0.0
  %1299 = vmatpush1.msra.mxu0 0.0
  %1300 = vmatprep.subr.mxu0 0.0
  %1301 = vmatpush1.msra.mxu0 0.0
  %1302 = vmatprep.subr.mxu0 0.0
  %1303 = vmatpush1.msra.mxu0 0.0
  %1304 = vmatprep.subr.mxu0 0.0
  %1305 = vmatpush1.msra.mxu0 0.0
  %1306 = vmatprep.subr.mxu0 0.0
  %1307 = vmatpush1.msra.mxu0 0.0
  %1308 = vmatprep.subr.mxu0 0.0
  %1309 = vmatpush1.msra.mxu0 0.0
  %1310 = vmatprep.subr.mxu0 0.0
  %1311 = vmatpush1.msra.mxu0 0.0
  %1312 = vmatprep.subr.mxu0 0.0
  %1313 = vmatpush1.msra.mxu0 0.0
  %1314 = vmatprep.subr.mxu0 0.0
  %1315 = vmatpush1.msra.mxu0 0.0
  %1316 = vmatprep.subr.mxu0 0.0
  %1317 = vmatpush1.msra.mxu0 0.0
  %1318 = vmatprep.subr.mxu0 0.0
  %1319 = vmatpush1.msra.mxu0 0.0
  %1320 = vmatprep.subr.mxu0 0.0
  %1321 = vmatpush1.msra.mxu0 0.0
  %1322 = vmatprep.subr.mxu0 0.0
  %1323 = vmatpush1.msra.mxu0 0.0
  %1324 = vmatprep.mubr.f32.mxu0 0.0
  %1325 = vmatmul.mubr.f32.gmra.mrb[0].mxu0 %v1187
  %v1326 = vpop.f32.mrb[0].mxu0
  %v1327 = vadd.f32 0.0, %v1326
  %v1328 = vpop.f32.mrb[0].mxu0
  %1329 = vdwg.mxu0
  %v1332 = vrot.slane %v1256, 6
  %v1333 = vrot.slane %v1258, 6
  %v1336 = vadd.f32 %v841, %v1332
  %v1337 = vadd.f32 %v842, %v1333
  %v1338 = vxor.u32 %v1336, 2147483648
  %v1339 = vxor.u32 %v1337, 2147483648
  %v1340 = vmul.f32 %v1338, 1.442695
  %v1341 = vpow.pop %v1340
  %v1342 = vmul.f32 %v1339, 1.442695
  %v1343 = vpow.pop %v1342
  %v1344 = vadd.f32 %v1341, 1.0
  %v1345 = vadd.f32 %v1343, 1.0
  %v1346 = vrcp.pop %v1344
  %v1347 = vmul.f32 1.0, %v1346
  %v1348 = vrcp.pop %v1345
  %v1349 = vmul.f32 1.0, %v1348
  %v1350 = vadd.f32 %v1327, %v1001
  %v1352 = vrot.slane %v1350, 6
  %v1354 = vmul.f32 %v1347, %v1352
  %v1355 = vadd.f32 %v778, %v1354
  %v1356 = vtanh.pop %v1355
  %v1357 = vsub.f32 1.0, %v1349
  %v1358 = vmul.f32 %v1357, %v1356
  %v1359 = vrot.slane %v1185, 7
  %v1361 = vmul.f32 %v1349, %v1359
  %v1362 = vadd.f32 %v1358, %v1361
  %v1364 = vrot.slane %v1362, 2
  %1366 = vmatprep.subr.mxu0 %v782
  %1367 = vmatpush1.msra.mxu0 %v781
  %1368 = vmatprep.subr.mxu0 %v785
  %1369 = vmatpush1.msra.mxu0 %v784
  %1370 = vmatprep.subr.mxu0 %v788
  %1371 = vmatpush1.msra.mxu0 %v787
  %1372 = vmatprep.subr.mxu0 %v791
  %1373 = vmatpush1.msra.mxu0 %v790
  %1374 = vmatprep.subr.mxu0 %v794
  %1375 = vmatpush1.msra.mxu0 %v793
  %1376 = vmatprep.subr.mxu0 %v797
  %1377 = vmatpush1.msra.mxu0 %v796
  %1378 = vmatprep.subr.mxu0 %v800
  %1379 = vmatpush1.msra.mxu0 %v799
  %1380 = vmatprep.subr.mxu0 %v803
  %1381 = vmatpush1.msra.mxu0 %v802
  %1382 = vmatprep.subr.mxu0 %v806
  %1383 = vmatpush1.msra.mxu0 %v805
  %1384 = vmatprep.subr.mxu0 %v809
  %1385 = vmatpush1.msra.mxu0 %v808
  %1386 = vmatprep.subr.mxu0 %v812
  %1387 = vmatpush1.msra.mxu0 %v811
  %1388 = vmatprep.subr.mxu0 %v815
  %1389 = vmatpush1.msra.mxu0 %v814
  %1390 = vmatprep.subr.mxu0 %v818
  %1391 = vmatpush1.msra.mxu0 %v817
  %1392 = vmatprep.subr.mxu0 %v821
  %1393 = vmatpush1.msra.mxu0 %v820
  %1394 = vmatprep.subr.mxu0 %v824
  %1395 = vmatpush1.msra.mxu0 %v823
  %1396 = vmatprep.subr.mxu0 %v827
  %1397 = vmatpush1.msra.mxu0 %v826
  %1398 = vmatprep.subr.mxu0 0.0
  %1399 = vmatpush1.msra.mxu0 0.0
  %1400 = vmatprep.subr.mxu0 0.0
  %1401 = vmatpush1.msra.mxu0 0.0
  %1402 = vmatprep.subr.mxu0 0.0
  %1403 = vmatpush1.msra.mxu0 0.0
  %1404 = vmatprep.subr.mxu0 0.0
  %1405 = vmatpush1.msra.mxu0 0.0
  %1406 = vmatprep.subr.mxu0 0.0
  %1407 = vmatpush1.msra.mxu0 0.0
  %1408 = vmatprep.subr.mxu0 0.0
  %1409 = vmatpush1.msra.mxu0 0.0
  %1410 = vmatprep.subr.mxu0 0.0
  %1411 = vmatpush1.msra.mxu0 0.0
  %1412 = vmatprep.subr.mxu0 0.0
  %1413 = vmatpush1.msra.mxu0 0.0
  %1414 = vmatprep.subr.mxu0 0.0
  %1415 = vmatpush1.msra.mxu0 0.0
  %1416 = vmatprep.subr.mxu0 0.0
  %1417 = vmatpush1.msra.mxu0 0.0
  %1418 = vmatprep.subr.mxu0 0.0
  %1419 = vmatpush1.msra.mxu0 0.0
  %1420 = vmatprep.subr.mxu0 0.0
  %1421 = vmatpush1.msra.mxu0 0.0
  %1422 = vmatprep.subr.mxu0 0.0
  %1423 = vmatpush1.msra.mxu0 0.0
  %1424 = vmatprep.subr.mxu0 0.0
  %1425 = vmatpush1.msra.mxu0 0.0
  %1426 = vmatprep.subr.mxu0 0.0
  %1427 = vmatpush1.msra.mxu0 0.0
  %1428 = vmatprep.subr.mxu0 0.0
  %1429 = vmatpush1.msra.mxu0 0.0
  %1430 = vmatprep.mubr.f32.mxu0 0.0
  %1431 = vmatmul.mubr.f32.gmra.mrb[0].mxu0 %v1364
  %v1432 = vpop.f32.mrb[0].mxu0
  %v1433 = vadd.f32 0.0, %v1432
  %v1434 = vpop.f32.mrb[0].mxu0
  %v1435 = vadd.f32 0.0, %v1434
  %1436 = vdwg.mxu0
  %1437 = vmatprep.subr.mxu0 0.0
  %1438 = vmatpush1.msra.mxu0 %v783
  %1439 = vmatprep.subr.mxu0 0.0
  %1440 = vmatpush1.msra.mxu0 %v786
  %1441 = vmatprep.subr.mxu0 0.0
  %1442 = vmatpush1.msra.mxu0 %v789
  %1443 = vmatprep.subr.mxu0 0.0
  %1444 = vmatpush1.msra.mxu0 %v792
  %1445 = vmatprep.subr.mxu0 0.0
  %1446 = vmatpush1.msra.mxu0 %v795
  %1447 = vmatprep.subr.mxu0 0.0
  %1448 = vmatpush1.msra.mxu0 %v798
  %1449 = vmatprep.subr.mxu0 0.0
  %1450 = vmatpush1.msra.mxu0 %v801
  %1451 = vmatprep.subr.mxu0 0.0
  %1452 = vmatpush1.msra.mxu0 %v804
  %1453 = vmatprep.subr.mxu0 0.0
  %1454 = vmatpush1.msra.mxu0 %v807
  %1455 = vmatprep.subr.mxu0 0.0
  %1456 = vmatpush1.msra.mxu0 %v810
  %1457 = vmatprep.subr.mxu0 0.0
  %1458 = vmatpush1.msra.mxu0 %v813
  %1459 = vmatprep.subr.mxu0 0.0
  %1460 = vmatpush1.msra.mxu0 %v816
  %1461 = vmatprep.subr.mxu0 0.0
  %1462 = vmatpush1.msra.mxu0 %v819
  %1463 = vmatprep.subr.mxu0 0.0
  %1464 = vmatpush1.msra.mxu0 %v822
  %1465 = vmatprep.subr.mxu0 0.0
  %1466 = vmatpush1.msra.mxu0 %v825
  %1467 = vmatprep.subr.mxu0 0.0
  %1468 = vmatpush1.msra.mxu0 %v828
  %1469 = vmatprep.subr.mxu0 0.0
  %1470 = vmatpush1.msra.mxu0 0.0
  %1471 = vmatprep.subr.mxu0 0.0
  %1472 = vmatpush1.msra.mxu0 0.0
  %1473 = vmatprep.subr.mxu0 0.0
  %1474 = vmatpush1.msra.mxu0 0.0
  %1475 = vmatprep.subr.mxu0 0.0
  %1476 = vmatpush1.msra.mxu0 0.0
  %1477 = vmatprep.subr.mxu0 0.0
  %1478 = vmatpush1.msra.mxu0 0.0
  %1479 = vmatprep.subr.mxu0 0.0
  %1480 = vmatpush1.msra.mxu0 0.0
  %1481 = vmatprep.subr.mxu0 0.0
  %1482 = vmatpush1.msra.mxu0 0.0
  %1483 = vmatprep.subr.mxu0 0.0
  %1484 = vmatpush1.msra.mxu0 0.0
  %1485 = vmatprep.subr.mxu0 0.0
  %1486 = vmatpush1.msra.mxu0 0.0
  %1487 = vmatprep.subr.mxu0 0.0
  %1488 = vmatpush1.msra.mxu0 0.0
  %1489 = vmatprep.subr.mxu0 0.0
  %1490 = vmatpush1.msra.mxu0 0.0
  %1491 = vmatprep.subr.mxu0 0.0
  %1492 = vmatpush1.msra.mxu0 0.0
  %1493 = vmatprep.subr.mxu0 0.0
  %1494 = vmatpush1.msra.mxu0 0.0
  %1495 = vmatprep.subr.mxu0 0.0
  %1496 = vmatpush1.msra.mxu0 0.0
  %1497 = vmatprep.subr.mxu0 0.0
  %1498 = vmatpush1.msra.mxu0 0.0
  %1499 = vmatprep.subr.mxu0 0.0
  %1500 = vmatpush1.msra.mxu0 0.0
  %1501 = vmatprep.mubr.f32.mxu0 0.0
  %1502 = vmatmul.mubr.f32.gmra.mrb[0].mxu0 %v1364
  %v1503 = vpop.f32.mrb[0].mxu0
  %v1504 = vadd.f32 0.0, %v1503
  %v1505 = vpop.f32.mrb[0].mxu0
  %1506 = vdwg.mxu0
  %v1509 = vrot.slane %v1433, 5
  %v1510 = vrot.slane %v1435, 5
  %v1513 = vadd.f32 %v841, %v1509
  %v1514 = vadd.f32 %v842, %v1510
  %v1515 = vxor.u32 %v1513, 2147483648
  %v1516 = vxor.u32 %v1514, 2147483648
  %v1517 = vmul.f32 %v1515, 1.442695
  %v1518 = vpow.pop %v1517
  %v1519 = vmul.f32 %v1516, 1.442695
  %v1520 = vpow.pop %v1519
  %v1521 = vadd.f32 %v1518, 1.0
  %v1522 = vadd.f32 %v1520, 1.0
  %v1523 = vrcp.pop %v1521
  %v1524 = vmul.f32 1.0, %v1523
  %v1525 = vrcp.pop %v1522
  %v1526 = vmul.f32 1.0, %v1525
  %v1527 = vadd.f32 %v1504, %v1001
  %v1529 = vrot.slane %v1527, 5
  %v1531 = vmul.f32 %v1524, %v1529
  %v1532 = vadd.f32 %v778, %v1531
  %v1533 = vtanh.pop %v1532
  %v1534 = vsub.f32 1.0, %v1526
  %v1535 = vmul.f32 %v1534, %v1533
  %v1536 = vrot.slane %v1362, 7
  %v1538 = vmul.f32 %v1526, %v1536
  %v1539 = vadd.f32 %v1535, %v1538
  %v1541 = vrot.slane %v1539, 3
  %1543 = vmatprep.subr.mxu0 %v782
  %1544 = vmatpush1.msra.mxu0 %v781
  %1545 = vmatprep.subr.mxu0 %v785
  %1546 = vmatpush1.msra.mxu0 %v784
  %1547 = vmatprep.subr.mxu0 %v788
  %1548 = vmatpush1.msra.mxu0 %v787
  %1549 = vmatprep.subr.mxu0 %v791
  %1550 = vmatpush1.msra.mxu0 %v790
  %1551 = vmatprep.subr.mxu0 %v794
  %1552 = vmatpush1.msra.mxu0 %v793
  %1553 = vmatprep.subr.mxu0 %v797
  %1554 = vmatpush1.msra.mxu0 %v796
  %1555 = vmatprep.subr.mxu0 %v800
  %1556 = vmatpush1.msra.mxu0 %v799
  %1557 = vmatprep.subr.mxu0 %v803
  %1558 = vmatpush1.msra.mxu0 %v802
  %1559 = vmatprep.subr.mxu0 %v806
  %1560 = vmatpush1.msra.mxu0 %v805
  %1561 = vmatprep.subr.mxu0 %v809
  %1562 = vmatpush1.msra.mxu0 %v808
  %1563 = vmatprep.subr.mxu0 %v812
  %1564 = vmatpush1.msra.mxu0 %v811
  %1565 = vmatprep.subr.mxu0 %v815
  %1566 = vmatpush1.msra.mxu0 %v814
  %1567 = vmatprep.subr.mxu0 %v818
  %1568 = vmatpush1.msra.mxu0 %v817
  %1569 = vmatprep.subr.mxu0 %v821
  %1570 = vmatpush1.msra.mxu0 %v820
  %1571 = vmatprep.subr.mxu0 %v824
  %1572 = vmatpush1.msra.mxu0 %v823
  %1573 = vmatprep.subr.mxu0 %v827
  %1574 = vmatpush1.msra.mxu0 %v826
  %1575 = vmatprep.subr.mxu0 0.0
  %1576 = vmatpush1.msra.mxu0 0.0
  %1577 = vmatprep.subr.mxu0 0.0
  %1578 = vmatpush1.msra.mxu0 0.0
  %1579 = vmatprep.subr.mxu0 0.0
  %1580 = vmatpush1.msra.mxu0 0.0
  %1581 = vmatprep.subr.mxu0 0.0
  %1582 = vmatpush1.msra.mxu0 0.0
  %1583 = vmatprep.subr.mxu0 0.0
  %1584 = vmatpush1.msra.mxu0 0.0
  %1585 = vmatprep.subr.mxu0 0.0
  %1586 = vmatpush1.msra.mxu0 0.0
  %1587 = vmatprep.subr.mxu0 0.0
  %1588 = vmatpush1.msra.mxu0 0.0
  %1589 = vmatprep.subr.mxu0 0.0
  %1590 = vmatpush1.msra.mxu0 0.0
  %1591 = vmatprep.subr.mxu0 0.0
  %1592 = vmatpush1.msra.mxu0 0.0
  %1593 = vmatprep.subr.mxu0 0.0
  %1594 = vmatpush1.msra.mxu0 0.0
  %1595 = vmatprep.subr.mxu0 0.0
  %1596 = vmatpush1.msra.mxu0 0.0
  %1597 = vmatprep.subr.mxu0 0.0
  %1598 = vmatpush1.msra.mxu0 0.0
  %1599 = vmatprep.subr.mxu0 0.0
  %1600 = vmatpush1.msra.mxu0 0.0
  %1601 = vmatprep.subr.mxu0 0.0
  %1602 = vmatpush1.msra.mxu0 0.0
  %1603 = vmatprep.subr.mxu0 0.0
  %1604 = vmatpush1.msra.mxu0 0.0
  %1605 = vmatprep.subr.mxu0 0.0
  %1606 = vmatpush1.msra.mxu0 0.0
  %1607 = vmatprep.mubr.f32.mxu0 0.0
  %1608 = vmatmul.mubr.f32.gmra.mrb[0].mxu0 %v1541
  %v1609 = vpop.f32.mrb[0].mxu0
  %v1610 = vadd.f32 0.0, %v1609
  %v1611 = vpop.f32.mrb[0].mxu0
  %v1612 = vadd.f32 0.0, %v1611
  %1613 = vdwg.mxu0
  %1614 = vmatprep.subr.mxu0 0.0
  %1615 = vmatpush1.msra.mxu0 %v783
  %1616 = vmatprep.subr.mxu0 0.0
  %1617 = vmatpush1.msra.mxu0 %v786
  %1618 = vmatprep.subr.mxu0 0.0
  %1619 = vmatpush1.msra.mxu0 %v789
  %1620 = vmatprep.subr.mxu0 0.0
  %1621 = vmatpush1.msra.mxu0 %v792
  %1622 = vmatprep.subr.mxu0 0.0
  %1623 = vmatpush1.msra.mxu0 %v795
  %1624 = vmatprep.subr.mxu0 0.0
  %1625 = vmatpush1.msra.mxu0 %v798
  %1626 = vmatprep.subr.mxu0 0.0
  %1627 = vmatpush1.msra.mxu0 %v801
  %1628 = vmatprep.subr.mxu0 0.0
  %1629 = vmatpush1.msra.mxu0 %v804
  %1630 = vmatprep.subr.mxu0 0.0
  %1631 = vmatpush1.msra.mxu0 %v807
  %1632 = vmatprep.subr.mxu0 0.0
  %1633 = vmatpush1.msra.mxu0 %v810
  %1634 = vmatprep.subr.mxu0 0.0
  %1635 = vmatpush1.msra.mxu0 %v813
  %1636 = vmatprep.subr.mxu0 0.0
  %1637 = vmatpush1.msra.mxu0 %v816
  %1638 = vmatprep.subr.mxu0 0.0
  %1639 = vmatpush1.msra.mxu0 %v819
  %1640 = vmatprep.subr.mxu0 0.0
  %1641 = vmatpush1.msra.mxu0 %v822
  %1642 = vmatprep.subr.mxu0 0.0
  %1643 = vmatpush1.msra.mxu0 %v825
  %1644 = vmatprep.subr.mxu0 0.0
  %1645 = vmatpush1.msra.mxu0 %v828
  %1646 = vmatprep.subr.mxu0 0.0
  %1647 = vmatpush1.msra.mxu0 0.0
  %1648 = vmatprep.subr.mxu0 0.0
  %1649 = vmatpush1.msra.mxu0 0.0
  %1650 = vmatprep.subr.mxu0 0.0
  %1651 = vmatpush1.msra.mxu0 0.0
  %1652 = vmatprep.subr.mxu0 0.0
  %1653 = vmatpush1.msra.mxu0 0.0
  %1654 = vmatprep.subr.mxu0 0.0
  %1655 = vmatpush1.msra.mxu0 0.0
  %1656 = vmatprep.subr.mxu0 0.0
  %1657 = vmatpush1.msra.mxu0 0.0
  %1658 = vmatprep.subr.mxu0 0.0
  %1659 = vmatpush1.msra.mxu0 0.0
  %1660 = vmatprep.subr.mxu0 0.0
  %1661 = vmatpush1.msra.mxu0 0.0
  %1662 = vmatprep.subr.mxu0 0.0
  %1663 = vmatpush1.msra.mxu0 0.0
  %1664 = vmatprep.subr.mxu0 0.0
  %1665 = vmatpush1.msra.mxu0 0.0
  %1666 = vmatprep.subr.mxu0 0.0
  %1667 = vmatpush1.msra.mxu0 0.0
  %1668 = vmatprep.subr.mxu0 0.0
  %1669 = vmatpush1.msra.mxu0 0.0
  %1670 = vmatprep.subr.mxu0 0.0
  %1671 = vmatpush1.msra.mxu0 0.0
  %1672 = vmatprep.subr.mxu0 0.0
  %1673 = vmatpush1.msra.mxu0 0.0
  %1674 = vmatprep.subr.mxu0 0.0
  %1675 = vmatpush1.msra.mxu0 0.0
  %1676 = vmatprep.subr.mxu0 0.0
  %1677 = vmatpush1.msra.mxu0 0.0
  %1678 = vmatprep.mubr.f32.mxu0 0.0
  %1679 = vmatmul.mubr.f32.gmra.mrb[0].mxu0 %v1541
  %v1680 = vpop.f32.mrb[0].mxu0
  %v1681 = vadd.f32 0.0, %v1680
  %v1682 = vpop.f32.mrb[0].mxu0
  %1683 = vdwg.mxu0
  %v1686 = vrot.slane %v1610, 4
  %v1687 = vrot.slane %v1612, 4
  %v1690 = vadd.f32 %v841, %v1686
  %v1691 = vadd.f32 %v842, %v1687
  %v1692 = vxor.u32 %v1690, 2147483648
  %v1693 = vxor.u32 %v1691, 2147483648
  %v1694 = vmul.f32 %v1692, 1.442695
  %v1695 = vpow.pop %v1694
  %v1696 = vmul.f32 %v1693, 1.442695
  %v1697 = vpow.pop %v1696
  %v1698 = vadd.f32 %v1695, 1.0
  %v1699 = vadd.f32 %v1697, 1.0
  %v1700 = vrcp.pop %v1698
  %v1701 = vmul.f32 1.0, %v1700
  %v1702 = vrcp.pop %v1699
  %v1703 = vmul.f32 1.0, %v1702
  %v1704 = vadd.f32 %v1681, %v1001
  %v1706 = vrot.slane %v1704, 4
  %v1708 = vmul.f32 %v1701, %v1706
  %v1709 = vadd.f32 %v778, %v1708
  %v1710 = vtanh.pop %v1709
  %v1711 = vsub.f32 1.0, %v1703
  %v1712 = vmul.f32 %v1711, %v1710
  %v1713 = vrot.slane %v1539, 7
  %v1715 = vmul.f32 %v1703, %v1713
  %v1716 = vadd.f32 %v1712, %v1715
  %v1718 = vrot.slane %v1716, 4
  %1720 = vmatprep.subr.mxu0 %v782
  %1721 = vmatpush1.msra.mxu0 %v781
  %1722 = vmatprep.subr.mxu0 %v785
  %1723 = vmatpush1.msra.mxu0 %v784
  %1724 = vmatprep.subr.mxu0 %v788
  %1725 = vmatpush1.msra.mxu0 %v787
  %1726 = vmatprep.subr.mxu0 %v791
  %1727 = vmatpush1.msra.mxu0 %v790
  %1728 = vmatprep.subr.mxu0 %v794
  %1729 = vmatpush1.msra.mxu0 %v793
  %1730 = vmatprep.subr.mxu0 %v797
  %1731 = vmatpush1.msra.mxu0 %v796
  %1732 = vmatprep.subr.mxu0 %v800
  %1733 = vmatpush1.msra.mxu0 %v799
  %1734 = vmatprep.subr.mxu0 %v803
  %1735 = vmatpush1.msra.mxu0 %v802
  %1736 = vmatprep.subr.mxu0 %v806
  %1737 = vmatpush1.msra.mxu0 %v805
  %1738 = vmatprep.subr.mxu0 %v809
  %1739 = vmatpush1.msra.mxu0 %v808
  %1740 = vmatprep.subr.mxu0 %v812
  %1741 = vmatpush1.msra.mxu0 %v811
  %1742 = vmatprep.subr.mxu0 %v815
  %1743 = vmatpush1.msra.mxu0 %v814
  %1744 = vmatprep.subr.mxu0 %v818
  %1745 = vmatpush1.msra.mxu0 %v817
  %1746 = vmatprep.subr.mxu0 %v821
  %1747 = vmatpush1.msra.mxu0 %v820
  %1748 = vmatprep.subr.mxu0 %v824
  %1749 = vmatpush1.msra.mxu0 %v823
  %1750 = vmatprep.subr.mxu0 %v827
  %1751 = vmatpush1.msra.mxu0 %v826
  %1752 = vmatprep.subr.mxu0 0.0
  %1753 = vmatpush1.msra.mxu0 0.0
  %1754 = vmatprep.subr.mxu0 0.0
  %1755 = vmatpush1.msra.mxu0 0.0
  %1756 = vmatprep.subr.mxu0 0.0
  %1757 = vmatpush1.msra.mxu0 0.0
  %1758 = vmatprep.subr.mxu0 0.0
  %1759 = vmatpush1.msra.mxu0 0.0
  %1760 = vmatprep.subr.mxu0 0.0
  %1761 = vmatpush1.msra.mxu0 0.0
  %1762 = vmatprep.subr.mxu0 0.0
  %1763 = vmatpush1.msra.mxu0 0.0
  %1764 = vmatprep.subr.mxu0 0.0
  %1765 = vmatpush1.msra.mxu0 0.0
  %1766 = vmatprep.subr.mxu0 0.0
  %1767 = vmatpush1.msra.mxu0 0.0
  %1768 = vmatprep.subr.mxu0 0.0
  %1769 = vmatpush1.msra.mxu0 0.0
  %1770 = vmatprep.subr.mxu0 0.0
  %1771 = vmatpush1.msra.mxu0 0.0
  %1772 = vmatprep.subr.mxu0 0.0
  %1773 = vmatpush1.msra.mxu0 0.0
  %1774 = vmatprep.subr.mxu0 0.0
  %1775 = vmatpush1.msra.mxu0 0.0
  %1776 = vmatprep.subr.mxu0 0.0
  %1777 = vmatpush1.msra.mxu0 0.0
  %1778 = vmatprep.subr.mxu0 0.0
  %1779 = vmatpush1.msra.mxu0 0.0
  %1780 = vmatprep.subr.mxu0 0.0
  %1781 = vmatpush1.msra.mxu0 0.0
  %1782 = vmatprep.subr.mxu0 0.0
  %1783 = vmatpush1.msra.mxu0 0.0
  %1784 = vmatprep.mubr.f32.mxu0 0.0
  %1785 = vmatmul.mubr.f32.gmra.mrb[0].mxu0 %v1718
  %v1786 = vpop.f32.mrb[0].mxu0
  %v1787 = vadd.f32 0.0, %v1786
  %v1788 = vpop.f32.mrb[0].mxu0
  %v1789 = vadd.f32 0.0, %v1788
  %1790 = vdwg.mxu0
  %1791 = vmatprep.subr.mxu0 0.0
  %1792 = vmatpush1.msra.mxu0 %v783
  %1793 = vmatprep.subr.mxu0 0.0
  %1794 = vmatpush1.msra.mxu0 %v786
  %1795 = vmatprep.subr.mxu0 0.0
  %1796 = vmatpush1.msra.mxu0 %v789
  %1797 = vmatprep.subr.mxu0 0.0
  %1798 = vmatpush1.msra.mxu0 %v792
  %1799 = vmatprep.subr.mxu0 0.0
  %1800 = vmatpush1.msra.mxu0 %v795
  %1801 = vmatprep.subr.mxu0 0.0
  %1802 = vmatpush1.msra.mxu0 %v798
  %1803 = vmatprep.subr.mxu0 0.0
  %1804 = vmatpush1.msra.mxu0 %v801
  %1805 = vmatprep.subr.mxu0 0.0
  %1806 = vmatpush1.msra.mxu0 %v804
  %1807 = vmatprep.subr.mxu0 0.0
  %1808 = vmatpush1.msra.mxu0 %v807
  %1809 = vmatprep.subr.mxu0 0.0
  %1810 = vmatpush1.msra.mxu0 %v810
  %1811 = vmatprep.subr.mxu0 0.0
  %1812 = vmatpush1.msra.mxu0 %v813
  %1813 = vmatprep.subr.mxu0 0.0
  %1814 = vmatpush1.msra.mxu0 %v816
  %1815 = vmatprep.subr.mxu0 0.0
  %1816 = vmatpush1.msra.mxu0 %v819
  %1817 = vmatprep.subr.mxu0 0.0
  %1818 = vmatpush1.msra.mxu0 %v822
  %1819 = vmatprep.subr.mxu0 0.0
  %1820 = vmatpush1.msra.mxu0 %v825
  %1821 = vmatprep.subr.mxu0 0.0
  %1822 = vmatpush1.msra.mxu0 %v828
  %1823 = vmatprep.subr.mxu0 0.0
  %1824 = vmatpush1.msra.mxu0 0.0
  %1825 = vmatprep.subr.mxu0 0.0
  %1826 = vmatpush1.msra.mxu0 0.0
  %1827 = vmatprep.subr.mxu0 0.0
  %1828 = vmatpush1.msra.mxu0 0.0
  %1829 = vmatprep.subr.mxu0 0.0
  %1830 = vmatpush1.msra.mxu0 0.0
  %1831 = vmatprep.subr.mxu0 0.0
  %1832 = vmatpush1.msra.mxu0 0.0
  %1833 = vmatprep.subr.mxu0 0.0
  %1834 = vmatpush1.msra.mxu0 0.0
  %1835 = vmatprep.subr.mxu0 0.0
  %1836 = vmatpush1.msra.mxu0 0.0
  %1837 = vmatprep.subr.mxu0 0.0
  %1838 = vmatpush1.msra.mxu0 0.0
  %1839 = vmatprep.subr.mxu0 0.0
  %1840 = vmatpush1.msra.mxu0 0.0
  %1841 = vmatprep.subr.mxu0 0.0
  %1842 = vmatpush1.msra.mxu0 0.0
  %1843 = vmatprep.subr.mxu0 0.0
  %1844 = vmatpush1.msra.mxu0 0.0
  %1845 = vmatprep.subr.mxu0 0.0
  %1846 = vmatpush1.msra.mxu0 0.0
  %1847 = vmatprep.subr.mxu0 0.0
  %1848 = vmatpush1.msra.mxu0 0.0
  %1849 = vmatprep.subr.mxu0 0.0
  %1850 = vmatpush1.msra.mxu0 0.0
  %1851 = vmatprep.subr.mxu0 0.0
  %1852 = vmatpush1.msra.mxu0 0.0
  %1853 = vmatprep.subr.mxu0 0.0
  %1854 = vmatpush1.msra.mxu0 0.0
  %1855 = vmatprep.mubr.f32.mxu0 0.0
  %1856 = vmatmul.mubr.f32.gmra.mrb[0].mxu0 %v1718
  %v1857 = vpop.f32.mrb[0].mxu0
  %v1858 = vadd.f32 0.0, %v1857
  %v1859 = vpop.f32.mrb[0].mxu0
  %1860 = vdwg.mxu0
  %v1863 = vrot.slane %v1787, 3
  %v1864 = vrot.slane %v1789, 3
  %v1867 = vadd.f32 %v841, %v1863
  %v1868 = vadd.f32 %v842, %v1864
  %v1869 = vxor.u32 %v1867, 2147483648
  %v1870 = vxor.u32 %v1868, 2147483648
  %v1871 = vmul.f32 %v1869, 1.442695
  %v1872 = vpow.pop %v1871
  %v1873 = vmul.f32 %v1870, 1.442695
  %v1874 = vpow.pop %v1873
  %v1875 = vadd.f32 %v1872, 1.0
  %v1876 = vadd.f32 %v1874, 1.0
  %v1877 = vrcp.pop %v1875
  %v1878 = vmul.f32 1.0, %v1877
  %v1879 = vrcp.pop %v1876
  %v1880 = vmul.f32 1.0, %v1879
  %v1881 = vadd.f32 %v1858, %v1001
  %v1883 = vrot.slane %v1881, 3
  %v1885 = vmul.f32 %v1878, %v1883
  %v1886 = vadd.f32 %v778, %v1885
  %v1887 = vtanh.pop %v1886
  %v1888 = vsub.f32 1.0, %v1880
  %v1889 = vmul.f32 %v1888, %v1887
  %v1890 = vrot.slane %v1716, 7
  %v1892 = vmul.f32 %v1880, %v1890
  %v1893 = vadd.f32 %v1889, %v1892
  %v1895 = vrot.slane %v1893, 5
  %1897 = vmatprep.subr.mxu0 %v782
  %1898 = vmatpush1.msra.mxu0 %v781
  %1899 = vmatprep.subr.mxu0 %v785
  %1900 = vmatpush1.msra.mxu0 %v784
  %1901 = vmatprep.subr.mxu0 %v788
  %1902 = vmatpush1.msra.mxu0 %v787
  %1903 = vmatprep.subr.mxu0 %v791
  %1904 = vmatpush1.msra.mxu0 %v790
  %1905 = vmatprep.subr.mxu0 %v794
  %1906 = vmatpush1.msra.mxu0 %v793
  %1907 = vmatprep.subr.mxu0 %v797
  %1908 = vmatpush1.msra.mxu0 %v796
  %1909 = vmatprep.subr.mxu0 %v800
  %1910 = vmatpush1.msra.mxu0 %v799
  %1911 = vmatprep.subr.mxu0 %v803
  %1912 = vmatpush1.msra.mxu0 %v802
  %1913 = vmatprep.subr.mxu0 %v806
  %1914 = vmatpush1.msra.mxu0 %v805
  %1915 = vmatprep.subr.mxu0 %v809
  %1916 = vmatpush1.msra.mxu0 %v808
  %1917 = vmatprep.subr.mxu0 %v812
  %1918 = vmatpush1.msra.mxu0 %v811
  %1919 = vmatprep.subr.mxu0 %v815
  %1920 = vmatpush1.msra.mxu0 %v814
  %1921 = vmatprep.subr.mxu0 %v818
  %1922 = vmatpush1.msra.mxu0 %v817
  %1923 = vmatprep.subr.mxu0 %v821
  %1924 = vmatpush1.msra.mxu0 %v820
  %1925 = vmatprep.subr.mxu0 %v824
  %1926 = vmatpush1.msra.mxu0 %v823
  %1927 = vmatprep.subr.mxu0 %v827
  %1928 = vmatpush1.msra.mxu0 %v826
  %1929 = vmatprep.subr.mxu0 0.0
  %1930 = vmatpush1.msra.mxu0 0.0
  %1931 = vmatprep.subr.mxu0 0.0
  %1932 = vmatpush1.msra.mxu0 0.0
  %1933 = vmatprep.subr.mxu0 0.0
  %1934 = vmatpush1.msra.mxu0 0.0
  %1935 = vmatprep.subr.mxu0 0.0
  %1936 = vmatpush1.msra.mxu0 0.0
  %1937 = vmatprep.subr.mxu0 0.0
  %1938 = vmatpush1.msra.mxu0 0.0
  %1939 = vmatprep.subr.mxu0 0.0
  %1940 = vmatpush1.msra.mxu0 0.0
  %1941 = vmatprep.subr.mxu0 0.0
  %1942 = vmatpush1.msra.mxu0 0.0
  %1943 = vmatprep.subr.mxu0 0.0
  %1944 = vmatpush1.msra.mxu0 0.0
  %1945 = vmatprep.subr.mxu0 0.0
  %1946 = vmatpush1.msra.mxu0 0.0
  %1947 = vmatprep.subr.mxu0 0.0
  %1948 = vmatpush1.msra.mxu0 0.0
  %1949 = vmatprep.subr.mxu0 0.0
  %1950 = vmatpush1.msra.mxu0 0.0
  %1951 = vmatprep.subr.mxu0 0.0
  %1952 = vmatpush1.msra.mxu0 0.0
  %1953 = vmatprep.subr.mxu0 0.0
  %1954 = vmatpush1.msra.mxu0 0.0
  %1955 = vmatprep.subr.mxu0 0.0
  %1956 = vmatpush1.msra.mxu0 0.0
  %1957 = vmatprep.subr.mxu0 0.0
  %1958 = vmatpush1.msra.mxu0 0.0
  %1959 = vmatprep.subr.mxu0 0.0
  %1960 = vmatpush1.msra.mxu0 0.0
  %1961 = vmatprep.mubr.f32.mxu0 0.0
  %1962 = vmatmul.mubr.f32.gmra.mrb[0].mxu0 %v1895
  %v1963 = vpop.f32.mrb[0].mxu0
  %v1964 = vadd.f32 0.0, %v1963
  %v1965 = vpop.f32.mrb[0].mxu0
  %v1966 = vadd.f32 0.0, %v1965
  %1967 = vdwg.mxu0
  %1968 = vmatprep.subr.mxu0 0.0
  %1969 = vmatpush1.msra.mxu0 %v783
  %1970 = vmatprep.subr.mxu0 0.0
  %1971 = vmatpush1.msra.mxu0 %v786
  %1972 = vmatprep.subr.mxu0 0.0
  %1973 = vmatpush1.msra.mxu0 %v789
  %1974 = vmatprep.subr.mxu0 0.0
  %1975 = vmatpush1.msra.mxu0 %v792
  %1976 = vmatprep.subr.mxu0 0.0
  %1977 = vmatpush1.msra.mxu0 %v795
  %1978 = vmatprep.subr.mxu0 0.0
  %1979 = vmatpush1.msra.mxu0 %v798
  %1980 = vmatprep.subr.mxu0 0.0
  %1981 = vmatpush1.msra.mxu0 %v801
  %1982 = vmatprep.subr.mxu0 0.0
  %1983 = vmatpush1.msra.mxu0 %v804
  %1984 = vmatprep.subr.mxu0 0.0
  %1985 = vmatpush1.msra.mxu0 %v807
  %1986 = vmatprep.subr.mxu0 0.0
  %1987 = vmatpush1.msra.mxu0 %v810
  %1988 = vmatprep.subr.mxu0 0.0
  %1989 = vmatpush1.msra.mxu0 %v813
  %1990 = vmatprep.subr.mxu0 0.0
  %1991 = vmatpush1.msra.mxu0 %v816
  %1992 = vmatprep.subr.mxu0 0.0
  %1993 = vmatpush1.msra.mxu0 %v819
  %1994 = vmatprep.subr.mxu0 0.0
  %1995 = vmatpush1.msra.mxu0 %v822
  %1996 = vmatprep.subr.mxu0 0.0
  %1997 = vmatpush1.msra.mxu0 %v825
  %1998 = vmatprep.subr.mxu0 0.0
  %1999 = vmatpush1.msra.mxu0 %v828
  %2000 = vmatprep.subr.mxu0 0.0
  %2001 = vmatpush1.msra.mxu0 0.0
  %2002 = vmatprep.subr.mxu0 0.0
  %2003 = vmatpush1.msra.mxu0 0.0
  %2004 = vmatprep.subr.mxu0 0.0
  %2005 = vmatpush1.msra.mxu0 0.0
  %2006 = vmatprep.subr.mxu0 0.0
  %2007 = vmatpush1.msra.mxu0 0.0
  %2008 = vmatprep.subr.mxu0 0.0
  %2009 = vmatpush1.msra.mxu0 0.0
  %2010 = vmatprep.subr.mxu0 0.0
  %2011 = vmatpush1.msra.mxu0 0.0
  %2012 = vmatprep.subr.mxu0 0.0
  %2013 = vmatpush1.msra.mxu0 0.0
  %2014 = vmatprep.subr.mxu0 0.0
  %2015 = vmatpush1.msra.mxu0 0.0
  %2016 = vmatprep.subr.mxu0 0.0
  %2017 = vmatpush1.msra.mxu0 0.0
  %2018 = vmatprep.subr.mxu0 0.0
  %2019 = vmatpush1.msra.mxu0 0.0
  %2020 = vmatprep.subr.mxu0 0.0
  %2021 = vmatpush1.msra.mxu0 0.0
  %2022 = vmatprep.subr.mxu0 0.0
  %2023 = vmatpush1.msra.mxu0 0.0
  %2024 = vmatprep.subr.mxu0 0.0
  %2025 = vmatpush1.msra.mxu0 0.0
  %2026 = vmatprep.subr.mxu0 0.0
  %2027 = vmatpush1.msra.mxu0 0.0
  %2028 = vmatprep.subr.mxu0 0.0
  %2029 = vmatpush1.msra.mxu0 0.0
  %2030 = vmatprep.subr.mxu0 0.0
  %2031 = vmatpush1.msra.mxu0 0.0
  %2032 = vmatprep.mubr.f32.mxu0 0.0
  %2033 = vmatmul.mubr.f32.gmra.mrb[0].mxu0 %v1895
  %v2034 = vpop.f32.mrb[0].mxu0
  %v2035 = vadd.f32 0.0, %v2034
  %v2036 = vpop.f32.mrb[0].mxu0
  %2037 = vdwg.mxu0
  %v2040 = vrot.slane %v1964, 2
  %v2041 = vrot.slane %v1966, 2
  %v2044 = vadd.f32 %v841, %v2040
  %v2045 = vadd.f32 %v842, %v2041
  %v2046 = vxor.u32 %v2044, 2147483648
  %v2047 = vxor.u32 %v2045, 2147483648
  %v2048 = vmul.f32 %v2046, 1.442695
  %v2049 = vpow.pop %v2048
  %v2050 = vmul.f32 %v2047, 1.442695
  %v2051 = vpow.pop %v2050
  %v2052 = vadd.f32 %v2049, 1.0
  %v2053 = vadd.f32 %v2051, 1.0
  %v2054 = vrcp.pop %v2052
  %v2055 = vmul.f32 1.0, %v2054
  %v2056 = vrcp.pop %v2053
  %v2057 = vmul.f32 1.0, %v2056
  %v2058 = vadd.f32 %v2035, %v1001
  %v2060 = vrot.slane %v2058, 2
  %v2062 = vmul.f32 %v2055, %v2060
  %v2063 = vadd.f32 %v778, %v2062
  %v2064 = vtanh.pop %v2063
  %v2065 = vsub.f32 1.0, %v2057
  %v2066 = vmul.f32 %v2065, %v2064
  %v2067 = vrot.slane %v1893, 7
  %v2069 = vmul.f32 %v2057, %v2067
  %v2070 = vadd.f32 %v2066, %v2069
  %v2072 = vrot.slane %v2070, 6
  %2074 = vmatprep.subr.mxu0 %v782
  %2075 = vmatpush1.msra.mxu0 %v781
  %2076 = vmatprep.subr.mxu0 %v785
  %2077 = vmatpush1.msra.mxu0 %v784
  %2078 = vmatprep.subr.mxu0 %v788
  %2079 = vmatpush1.msra.mxu0 %v787
  %2080 = vmatprep.subr.mxu0 %v791
  %2081 = vmatpush1.msra.mxu0 %v790
  %2082 = vmatprep.subr.mxu0 %v794
  %2083 = vmatpush1.msra.mxu0 %v793
  %2084 = vmatprep.subr.mxu0 %v797
  %2085 = vmatpush1.msra.mxu0 %v796
  %2086 = vmatprep.subr.mxu0 %v800
  %2087 = vmatpush1.msra.mxu0 %v799
  %2088 = vmatprep.subr.mxu0 %v803
  %2089 = vmatpush1.msra.mxu0 %v802
  %2090 = vmatprep.subr.mxu0 %v806
  %2091 = vmatpush1.msra.mxu0 %v805
  %2092 = vmatprep.subr.mxu0 %v809
  %2093 = vmatpush1.msra.mxu0 %v808
  %2094 = vmatprep.subr.mxu0 %v812
  %2095 = vmatpush1.msra.mxu0 %v811
  %2096 = vmatprep.subr.mxu0 %v815
  %2097 = vmatpush1.msra.mxu0 %v814
  %2098 = vmatprep.subr.mxu0 %v818
  %2099 = vmatpush1.msra.mxu0 %v817
  %2100 = vmatprep.subr.mxu0 %v821
  %2101 = vmatpush1.msra.mxu0 %v820
  %2102 = vmatprep.subr.mxu0 %v824
  %2103 = vmatpush1.msra.mxu0 %v823
  %2104 = vmatprep.subr.mxu0 %v827
  %2105 = vmatpush1.msra.mxu0 %v826
  %2106 = vmatprep.subr.mxu0 0.0
  %2107 = vmatpush1.msra.mxu0 0.0
  %2108 = vmatprep.subr.mxu0 0.0
  %2109 = vmatpush1.msra.mxu0 0.0
  %2110 = vmatprep.subr.mxu0 0.0
  %2111 = vmatpush1.msra.mxu0 0.0
  %2112 = vmatprep.subr.mxu0 0.0
  %2113 = vmatpush1.msra.mxu0 0.0
  %2114 = vmatprep.subr.mxu0 0.0
  %2115 = vmatpush1.msra.mxu0 0.0
  %2116 = vmatprep.subr.mxu0 0.0
  %2117 = vmatpush1.msra.mxu0 0.0
  %2118 = vmatprep.subr.mxu0 0.0
  %2119 = vmatpush1.msra.mxu0 0.0
  %2120 = vmatprep.subr.mxu0 0.0
  %2121 = vmatpush1.msra.mxu0 0.0
  %2122 = vmatprep.subr.mxu0 0.0
  %2123 = vmatpush1.msra.mxu0 0.0
  %2124 = vmatprep.subr.mxu0 0.0
  %2125 = vmatpush1.msra.mxu0 0.0
  %2126 = vmatprep.subr.mxu0 0.0
  %2127 = vmatpush1.msra.mxu0 0.0
  %2128 = vmatprep.subr.mxu0 0.0
  %2129 = vmatpush1.msra.mxu0 0.0
  %2130 = vmatprep.subr.mxu0 0.0
  %2131 = vmatpush1.msra.mxu0 0.0
  %2132 = vmatprep.subr.mxu0 0.0
  %2133 = vmatpush1.msra.mxu0 0.0
  %2134 = vmatprep.subr.mxu0 0.0
  %2135 = vmatpush1.msra.mxu0 0.0
  %2136 = vmatprep.subr.mxu0 0.0
  %2137 = vmatpush1.msra.mxu0 0.0
  %2138 = vmatprep.mubr.f32.mxu0 0.0
  %2139 = vmatmul.mubr.f32.gmra.mrb[0].mxu0 %v2072
  %v2140 = vpop.f32.mrb[0].mxu0
  %v2141 = vadd.f32 0.0, %v2140
  %v2142 = vpop.f32.mrb[0].mxu0
  %v2143 = vadd.f32 0.0, %v2142
  %2144 = vdwg.mxu0
  %2145 = vmatprep.subr.mxu0 0.0
  %2146 = vmatpush1.msra.mxu0 %v783
  %2147 = vmatprep.subr.mxu0 0.0
  %2148 = vmatpush1.msra.mxu0 %v786
  %2149 = vmatprep.subr.mxu0 0.0
  %2150 = vmatpush1.msra.mxu0 %v789
  %2151 = vmatprep.subr.mxu0 0.0
  %2152 = vmatpush1.msra.mxu0 %v792
  %2153 = vmatprep.subr.mxu0 0.0
  %2154 = vmatpush1.msra.mxu0 %v795
  %2155 = vmatprep.subr.mxu0 0.0
  %2156 = vmatpush1.msra.mxu0 %v798
  %2157 = vmatprep.subr.mxu0 0.0
  %2158 = vmatpush1.msra.mxu0 %v801
  %2159 = vmatprep.subr.mxu0 0.0
  %2160 = vmatpush1.msra.mxu0 %v804
  %2161 = vmatprep.subr.mxu0 0.0
  %2162 = vmatpush1.msra.mxu0 %v807
  %2163 = vmatprep.subr.mxu0 0.0
  %2164 = vmatpush1.msra.mxu0 %v810
  %2165 = vmatprep.subr.mxu0 0.0
  %2166 = vmatpush1.msra.mxu0 %v813
  %2167 = vmatprep.subr.mxu0 0.0
  %2168 = vmatpush1.msra.mxu0 %v816
  %2169 = vmatprep.subr.mxu0 0.0
  %2170 = vmatpush1.msra.mxu0 %v819
  %2171 = vmatprep.subr.mxu0 0.0
  %2172 = vmatpush1.msra.mxu0 %v822
  %2173 = vmatprep.subr.mxu0 0.0
  %2174 = vmatpush1.msra.mxu0 %v825
  %2175 = vmatprep.subr.mxu0 0.0
  %2176 = vmatpush1.msra.mxu0 %v828
  %2177 = vmatprep.subr.mxu0 0.0
  %2178 = vmatpush1.msra.mxu0 0.0
  %2179 = vmatprep.subr.mxu0 0.0
  %2180 = vmatpush1.msra.mxu0 0.0
  %2181 = vmatprep.subr.mxu0 0.0
  %2182 = vmatpush1.msra.mxu0 0.0
  %2183 = vmatprep.subr.mxu0 0.0
  %2184 = vmatpush1.msra.mxu0 0.0
  %2185 = vmatprep.subr.mxu0 0.0
  %2186 = vmatpush1.msra.mxu0 0.0
  %2187 = vmatprep.subr.mxu0 0.0
  %2188 = vmatpush1.msra.mxu0 0.0
  %2189 = vmatprep.subr.mxu0 0.0
  %2190 = vmatpush1.msra.mxu0 0.0
  %2191 = vmatprep.subr.mxu0 0.0
  %2192 = vmatpush1.msra.mxu0 0.0
  %2193 = vmatprep.subr.mxu0 0.0
  %2194 = vmatpush1.msra.mxu0 0.0
  %2195 = vmatprep.subr.mxu0 0.0
  %2196 = vmatpush1.msra.mxu0 0.0
  %2197 = vmatprep.subr.mxu0 0.0
  %2198 = vmatpush1.msra.mxu0 0.0
  %2199 = vmatprep.subr.mxu0 0.0
  %2200 = vmatpush1.msra.mxu0 0.0
  %2201 = vmatprep.subr.mxu0 0.0
  %2202 = vmatpush1.msra.mxu0 0.0
  %2203 = vmatprep.subr.mxu0 0.0
  %2204 = vmatpush1.msra.mxu0 0.0
  %2205 = vmatprep.subr.mxu0 0.0
  %2206 = vmatpush1.msra.mxu0 0.0
  %2207 = vmatprep.subr.mxu0 0.0
  %2208 = vmatpush1.msra.mxu0 0.0
  %2209 = vmatprep.mubr.f32.mxu0 0.0
  %2210 = vmatmul.mubr.f32.gmra.mrb[0].mxu0 %v2072
  %v2211 = vpop.f32.mrb[0].mxu0
  %v2212 = vadd.f32 0.0, %v2211
  %v2213 = vpop.f32.mrb[0].mxu0
  %2214 = vdwg.mxu0
  %v2217 = vrot.slane %v2141, 1
  %v2218 = vrot.slane %v2143, 1
  %v2221 = vadd.f32 %v841, %v2217
  %v2222 = vadd.f32 %v842, %v2218
  %v2223 = vxor.u32 %v2221, 2147483648
  %v2224 = vxor.u32 %v2222, 2147483648
  %v2225 = vmul.f32 %v2223, 1.442695
  %v2226 = vpow.pop %v2225
  %v2227 = vmul.f32 %v2224, 1.442695
  %v2228 = vpow.pop %v2227
  %v2229 = vadd.f32 %v2226, 1.0
  %v2230 = vadd.f32 %v2228, 1.0
  %v2231 = vrcp.pop %v2229
  %v2232 = vmul.f32 1.0, %v2231
  %v2233 = vrcp.pop %v2230
  %v2234 = vmul.f32 1.0, %v2233
  %v2235 = vadd.f32 %v2212, %v1001
  %v2237 = vrot.slane %v2235, 1
  %v2239 = vmul.f32 %v2232, %v2237
  %v2240 = vadd.f32 %v778, %v2239
  %v2241 = vtanh.pop %v2240
  %v2242 = vsub.f32 1.0, %v2234
  %v2243 = vmul.f32 %v2242, %v2241
  %v2244 = vrot.slane %v2070, 7
  %v2246 = vmul.f32 %v2234, %v2244
  %v2247 = vadd.f32 %v2243, %v2246
  %vm2248 = vcmask 1040384
  %v2249 = vsel %vm2248, %v1010, %v1185
  %vm2250 = vcmask 1041408
  %v2251 = vsel %vm2250, %v2249, %v1362
  %vm2252 = vcmask 1042432
  %v2253 = vsel %vm2252, %v2251, %v1539
  %vm2254 = vcmask 1043456
  %v2255 = vsel %vm2254, %v2253, %v1716
  %vm2256 = vcmask 1044480
  %v2257 = vsel %vm2256, %v2255, %v1893
  %vm2258 = vcmask 1045504
  %v2259 = vsel %vm2258, %v2257, %v2070
  %vm2260 = vcmask 1046528
  %v2261 = vsel %vm2260, %v2259, %v2247
  %v2262 = vld [vmem:[%s9] sm:$0xff]
  %v2263 = vld [vmem:[%s9 + $0x8] sm:$0xff]
  %v2264 = vld [vmem:[%s9 + $0x10] sm:$0xff]
  %v2265 = vld [vmem:[%s9 + $0x18] sm:$0xff]
  %v2266 = vld [vmem:[%s9 + $0x20] sm:$0xff]
  %v2267 = vld [vmem:[%s9 + $0x28] sm:$0xff]
  %v2268 = vld [vmem:[%s9 + $0x30] sm:$0xff]
  %v2269 = vld [vmem:[%s9 + $0x38] sm:$0xff]
  %v2270 = vld [vmem:[%s9 + $0x40] sm:$0xff]
  %v2271 = vld [vmem:[%s9 + $0x48] sm:$0xff]
  %v2272 = vld [vmem:[%s9 + $0x50] sm:$0xff]
  %v2273 = vld [vmem:[%s9 + $0x58] sm:$0xff]
  %v2274 = vld [vmem:[%s9 + $0x60] sm:$0xff]
  %v2275 = vld [vmem:[%s9 + $0x68] sm:$0xff]
  %v2276 = vld [vmem:[%s9 + $0x70] sm:$0xff]
  %v2277 = vld [vmem:[%s9 + $0x78] sm:$0xff]
  %v2278 = vld [vmem:[%s10] sm:$0x1]
  %v2280 = vlaneseq
  %v2281 = vshrl.u32 %v2280, 7
  %v2282 = vsub.s32 0, %v2281
  %v2283 = vrot.slane %v2278, %v2282
  %2285 = vmatprep.subr.mxu0 0.0
  %2286 = vmatpush1.msra.mxu0 %v2262
  %2287 = vmatprep.subr.mxu0 0.0
  %2288 = vmatpush1.msra.mxu0 %v2263
  %2289 = vmatprep.subr.mxu0 0.0
  %2290 = vmatpush1.msra.mxu0 %v2264
  %2291 = vmatprep.subr.mxu0 0.0
  %2292 = vmatpush1.msra.mxu0 %v2265
  %2293 = vmatprep.subr.mxu0 0.0
  %2294 = vmatpush1.msra.mxu0 %v2266
  %2295 = vmatprep.subr.mxu0 0.0
  %2296 = vmatpush1.msra.mxu0 %v2267
  %2297 = vmatprep.subr.mxu0 0.0
  %2298 = vmatpush1.msra.mxu0 %v2268
  %2299 = vmatprep.subr.mxu0 0.0
  %2300 = vmatpush1.msra.mxu0 %v2269
  %2301 = vmatprep.subr.mxu0 0.0
  %2302 = vmatpush1.msra.mxu0 %v2270
  %2303 = vmatprep.subr.mxu0 0.0
  %2304 = vmatpush1.msra.mxu0 %v2271
  %2305 = vmatprep.subr.mxu0 0.0
  %2306 = vmatpush1.msra.mxu0 %v2272
  %2307 = vmatprep.subr.mxu0 0.0
  %2308 = vmatpush1.msra.mxu0 %v2273
  %2309 = vmatprep.subr.mxu0 0.0
  %2310 = vmatpush1.msra.mxu0 %v2274
  %2311 = vmatprep.subr.mxu0 0.0
  %2312 = vmatpush1.msra.mxu0 %v2275
  %2313 = vmatprep.subr.mxu0 0.0
  %2314 = vmatpush1.msra.mxu0 %v2276
  %2315 = vmatprep.subr.mxu0 0.0
  %2316 = vmatpush1.msra.mxu0 %v2277
  %2317 = vmatprep.subr.mxu0 0.0
  %2318 = vmatpush1.msra.mxu0 0.0
  %2319 = vmatprep.subr.mxu0 0.0
  %2320 = vmatpush1.msra.mxu0 0.0
  %2321 = vmatprep.subr.mxu0 0.0
  %2322 = vmatpush1.msra.mxu0 0.0
  %2323 = vmatprep.subr.mxu0 0.0
  %2324 = vmatpush1.msra.mxu0 0.0
  %2325 = vmatprep.subr.mxu0 0.0
  %2326 = vmatpush1.msra.mxu0 0.0
  %2327 = vmatprep.subr.mxu0 0.0
  %2328 = vmatpush1.msra.mxu0 0.0
  %2329 = vmatprep.subr.mxu0 0.0
  %2330 = vmatpush1.msra.mxu0 0.0
  %2331 = vmatprep.subr.mxu0 0.0
  %2332 = vmatpush1.msra.mxu0 0.0
  %2333 = vmatprep.subr.mxu0 0.0
  %2334 = vmatpush1.msra.mxu0 0.0
  %2335 = vmatprep.subr.mxu0 0.0
  %2336 = vmatpush1.msra.mxu0 0.0
  %2337 = vmatprep.subr.mxu0 0.0
  %2338 = vmatpush1.msra.mxu0 0.0
  %2339 = vmatprep.subr.mxu0 0.0
  %2340 = vmatpush1.msra.mxu0 0.0
  %2341 = vmatprep.subr.mxu0 0.0
  %2342 = vmatpush1.msra.mxu0 0.0
  %2343 = vmatprep.subr.mxu0 0.0
  %2344 = vmatpush1.msra.mxu0 0.0
  %2345 = vmatprep.subr.mxu0 0.0
  %2346 = vmatpush1.msra.mxu0 0.0
  %2347 = vmatprep.subr.mxu0 0.0
  %2348 = vmatpush1.msra.mxu0 0.0
  %2349 = vmatprep.mubr.f32.mxu0 0.0
  %2350 = vmatmul.mubr.f32.gmra.mrb[0].mxu0 %v2261
  %v2351 = vpop.f32.mrb[0].mxu0
  %v2352 = vadd.f32 %v2283, %v2351
  %v2353 = vpop.f32.mrb[0].mxu0
  %2354 = vdwg.mxu0
  %v2355 = vlaneseq
  %v2356 = vand.u32 %v2355, 127
  %vm2357 = vcmp.lt.s32.totalorder %v2356, 64
  %v2358 = vsel %vm2357, %v2352, -inf
  %2359 = vmax.xlane.f32.xlu0 %v2358
  %v2360 = vpop.xlane.xlu0 %2359
  %v2361 = vsub.f32 %v2358, %v2360
  %v2362 = vmul.f32 %v2361, 1.442695
  %v2363 = vpow.pop %v2362
  %2364 = vadd.xlane.f32.xlu0 %v2363
  %v2365 = vpop.xlane.xlu0 %2364
  %v2366 = vrcp.pop %v2365
  %v2367 = vmul.f32 %v2363, %v2366
  %vm2368 = vcmp.eq.s32.totalorder %v2356, 64
  %v2369 = vsel %vm2368, %v2352, 0.0
  %v2370 = vadd.f32 %v2367, %v2369
  %2371 = vst [vmem:[%s11] sm:$0xff] %v2370
  // Predicated region
  $region46: #{jassnet_forward.1} parent=0 // pred_check
    _
  $region47: #{jassnet_forward.1} parent=0 // pred_check_branch
    %2373 = sbr.rel (0) target = $region49
  $region48: #{jassnet_forward.1} parent=0 // pred_region
    _
  $region49: #{jassnet_forward.1} parent=0 // pred_fallthru
    _
  // Predicated region
  $region50: #{jassnet_forward.1} parent=0 // pred_check
    _
  $region51: #{jassnet_forward.1} parent=0 // pred_check_branch
    %2375 = sbr.rel (0) target = $region53
  $region52: #{jassnet_forward.1} parent=0 // pred_region
    _
  $region53: #{jassnet_forward.1} parent=0 // pred_fallthru
    _

</llo_original>
